<compile_context>
chip_gen: v6e
topology: v6e:2x2x1
jax: 0.10.0
libtpu: 0.0.40
codegen_flags: <defaults>
</compile_context>

<pallas_src>
import jax
import jax.numpy as jnp
from jax.experimental import pallas as pl
from jax.experimental.pallas import tpu as pltpu

FEAT_DIM = 128   # small stand-in for the module default feat_dim=400
OUT_PAD = 128    # lane-dense packed head output: offence = cols 0:4, action = cols 4:12
LN_EPS = 1e-5    # torch.nn.LayerNorm default eps


# ---------------------------------------------------------------------------
# Pallas kernel: max-over-views + inter MLP + fused heads, all in one block.
# ---------------------------------------------------------------------------
def _norm(x):
    """Fused single-pass LayerNorm normalization (affine folded into the
    following Linear offline). f32 math (safe on v5e too)."""
    inv_n = 1.0 / x.shape[-1]
    s = jnp.sum(x, axis=-1, keepdims=True)
    ss = jnp.sum(x * x, axis=-1, keepdims=True)
    mu = s * inv_n
    var = ss * inv_n - mu * mu
    return (x - mu) * jax.lax.rsqrt(var + LN_EPS)


def mvaggregate_kernel(feats_ref, w_ref, wout_ref, bias_ref, out_ref):
    V = feats_ref.shape[0]
    F = feats_ref.shape[-1]
    mm_dtype = w_ref.dtype                       # bf16 on the production path

    # ---- ViewMaxAggregate: unrolled elementwise max over the V leading slices.
    pooled = feats_ref[0].astype(jnp.float32)
    for v in range(1, V):
        pooled = jnp.maximum(pooled, feats_ref[v].astype(jnp.float32))

    biases = bias_ref[...]                       # (4, 2F) f32 bias pack

    # ---- self.inter : LN -> Linear(F,F) -> Linear(F,F) (LN affine folded) ----
    w_inter = w_ref[0]                           # (F, 2F) = [w1_folded | w2]
    n0 = _norm(pooled).astype(mm_dtype)
    h = jnp.dot(n0, w_inter[:, :F],
                preferred_element_type=jnp.float32) + biases[0:1, :F]
    inter = jnp.dot(h.astype(mm_dtype), w_inter[:, F:],
                    preferred_element_type=jnp.float32) + biases[1:2, :F]

    # ---- fc_offence + fc_action, fused ---------------------------------------
    # Both head LayerNorms normalize the same `inter` -> normalize once.
    n1 = _norm(inter).astype(mm_dtype)
    w_heads = w_ref[1]                           # (F, 2F) = [wo1_folded | wa1_folded]
    hh = jnp.dot(n1, w_heads,
                 preferred_element_type=jnp.float32) + biases[2:3, :]   # (bt, 2F)

    # Block-diagonal, lane-dense final projection: cols 0:4 offence, 4:12 action.
    out_ref[...] = (jnp.dot(hh.astype(mm_dtype), wout_ref[...],
                            preferred_element_type=jnp.float32)
                    + biases[3:4, :out_ref.shape[-1]]).astype(out_ref.dtype)


# ---------------------------------------------------------------------------
# Parameter prep (offline constant folding + packing into 3 arrays).
# ---------------------------------------------------------------------------
def prepare_params(p, dtype=jnp.bfloat16):
    F = p["w1"].shape[0]

    def fold(g, b, W, c):
        # (x*g + b) @ W + c  ==  x @ (g[:,None]*W) + (b @ W + c)
        return g.reshape(F, 1) * W, b.reshape(1, F) @ W + c

    w1f, b1f = fold(p["gi"], p["bi"], p["w1"], p["b1"])
    wo1f, bo1f = fold(p["go"], p["bo"], p["wo1"], p["bo1"])
    wa1f, ba1f = fold(p["ga"], p["ba"], p["wa1"], p["ba1"])

    w_inter = jnp.concatenate([w1f, p["w2"]], axis=1)      # (F, 2F)
    w_heads = jnp.concatenate([wo1f, wa1f], axis=1)        # (F, 2F)
    w_stack = jnp.stack([w_inter, w_heads], axis=0)        # (2, F, 2F)  -> one DMA

    # Block-diagonal final projection padded to a lane-dense 128-wide output.
    w_out = jnp.zeros((2 * F, OUT_PAD), jnp.float32)
    w_out = w_out.at[:F, 0:4].set(p["wo2"])
    w_out = w_out.at[F:, 4:12].set(p["wa2"])

    biases = jnp.zeros((4, 2 * F), jnp.float32)
    biases = biases.at[0, :F].set(b1f[0])
    biases = biases.at[1, :F].set(p["b2"][0])
    biases = biases.at[2, :F].set(bo1f[0])
    biases = biases.at[2, F:].set(ba1f[0])
    biases = biases.at[3, 0:4].set(p["bo2"][0])
    biases = biases.at[3, 4:12].set(p["ba2"][0])

    # Weight slabs in the matmul dtype (bf16 for production); biases stay f32.
    return w_stack.astype(dtype), w_out.astype(dtype), biases


# ---------------------------------------------------------------------------
# Batch tiling
# ---------------------------------------------------------------------------
def _round_up(x, m):
    return (x + m - 1) // m * m


def _pick_batch_tile(B):
    """Batch tile: multiple of 8 sublanes; >=2 tiles whenever B allows (so the
    second v7x TensorCore has work); capped at 256 rows so a double-buffered
    feats tile stays well inside v7x's 64 MiB VMEM even at production F=512."""
    if B <= 8:
        bt = 8
    else:
        bt = min(256, _round_up(_round_up(B, 2) // 2, 8))
    return bt, _round_up(B, bt)


# ---------------------------------------------------------------------------
# Wrapper
# ---------------------------------------------------------------------------
def mvaggregate_forward(feats, prepped):
    """feats: (B, V, F). Returns (pred_offence (B,4), pred_action (B,8), attention)."""
    B, V, F = feats.shape
    w_stack, w_out, biases = prepped

    bt, b_pad = _pick_batch_tile(B)
    grid = (b_pad // bt,)

    # View axis leading -> minor tile of the feats block is a dense (bt, F).
    feats_vbf = jnp.transpose(feats, (1, 0, 2))
    if b_pad != B:
        feats_vbf = jnp.pad(feats_vbf, ((0, 0), (0, b_pad - B), (0, 0)))

    feats_tile_bytes = bt * V * F * feats.dtype.itemsize
    out_tile_bytes = bt * OUT_PAD * 4
    param_bytes = sum(int(a.size) * a.dtype.itemsize for a in (w_stack, w_out, biases))
    vmem_limit = int(min(64 << 20,
                         max(32 << 20,
                             2 * (feats_tile_bytes + out_tile_bytes + param_bytes)
                             + (4 << 20))))

    cost = pl.CostEstimate(
        flops=2 * b_pad * (F * F + F * F + F * 2 * F + 2 * F * OUT_PAD),
        transcendentals=0,
        bytes_accessed=int(feats_vbf.size) * feats_vbf.dtype.itemsize
        + param_bytes + b_pad * OUT_PAD * 4,
    )

    def _param_spec(shape, imap, pm):
        if pm is None:
            return pl.BlockSpec(shape, imap)
        return pl.BlockSpec(shape, imap, pipeline_mode=pm)

    def build(weight_pipeline_mode):
        return pl.pallas_call(
            mvaggregate_kernel,
            out_shape=jax.ShapeDtypeStruct((b_pad, OUT_PAD), jnp.float32),
            grid_spec=pltpu.PrefetchScalarGridSpec(
                num_scalar_prefetch=0,
                grid=grid,
                in_specs=[
                    pl.BlockSpec((V, bt, F), lambda i: (0, i, 0)),
                    _param_spec(w_stack.shape, lambda i: (0, 0, 0),
                                weight_pipeline_mode),
                    _param_spec(w_out.shape, lambda i: (0, 0),
                                weight_pipeline_mode),
                    _param_spec(biases.shape, lambda i: (0, 0),
                                weight_pipeline_mode),
                ],
                out_specs=pl.BlockSpec((bt, OUT_PAD), lambda i: (i, 0)),
            ),
            compiler_params=pltpu.CompilerParams(
                dimension_semantics=("parallel",),
                vmem_limit_bytes=vmem_limit),
            cost_estimate=cost,
        )

    try:
        # Constant-index parameter slabs: single-buffer (no per-step refetch),
        # saving VMEM (most valuable on v7x's 64 MiB).
        out = build(pl.Buffered(1))(feats_vbf, w_stack, w_out, biases)
    except Exception:
        # Fallback for JAX builds that reject single-buffer pipeline_mode.
        out = build(None)(feats_vbf, w_stack, w_out, biases)

    pred_offence = out[:B, 0:4]
    pred_action = out[:B, 4:12]
    # agr_type='max': attention == aux == per-view features (lifting_net = identity)
    return pred_offence, pred_action, feats


# ---------------------------------------------------------------------------
# Glue: synthetic backbone (the external `model` arg) + deterministic params.
# ---------------------------------------------------------------------------
def synthetic_backbone(x_bvcdhw, w_backbone):
    # batch_tensor(mvimages, dim=1, squeeze=True): (B,V,C,D,H,W) -> (B*V,C,D,H,W)
    B, V, C, D, H, W = x_bvcdhw.shape
    flat = x_bvcdhw.reshape(B * V, C * D * H * W)
    feats = flat @ w_backbone                      # stand-in video backbone -> (B*V, F)
    # unbatch_tensor(..., B, dim=1, unsqueeze=True): (B*V, F) -> (B, V, F)
    return feats.reshape(B, V, -1)


def init_params(key, feat_dim):
    ks = jax.random.split(key, 12)
    lin = lambda k, fin, fout: 0.05 * jax.random.normal(k, (fin, fout), jnp.float32)
    gamma = lambda k, n: 1.0 + 0.1 * jax.random.normal(k, (1, n), jnp.float32)
    beta = lambda k, n: 0.05 * jax.random.normal(k, (1, n), jnp.float32)
    bias = lambda n: 0.01 * jnp.ones((1, n), jnp.float32)
    return dict(
        # inter
        gi=gamma(ks[0], feat_dim), bi=beta(ks[1], feat_dim),
        w1=lin(ks[2], feat_dim, feat_dim), b1=bias(feat_dim),
        w2=lin(ks[3], feat_dim, feat_dim), b2=bias(feat_dim),
        # fc_offence
        go=gamma(ks[4], feat_dim), bo=beta(ks[5], feat_dim),
        wo1=lin(ks[6], feat_dim, feat_dim), bo1=bias(feat_dim),
        wo2=lin(ks[7], feat_dim, 4), bo2=bias(4),
        # fc_action
        ga=gamma(ks[8], feat_dim), ba=beta(ks[9], feat_dim),
        wa1=lin(ks[10], feat_dim, feat_dim), ba1=bias(feat_dim),
        wa2=lin(ks[11], feat_dim, 8), ba2=bias(8),
    )


def reference_forward(feats, p):
    """Pure-JAX reference of MVAggregate (agr_type='max'), original (unfolded) math."""
    pooled = jnp.max(feats, axis=1)

    def ln(x, g, b):
        mu = x.mean(-1, keepdims=True)
        var = ((x - mu) ** 2).mean(-1, keepdims=True)
        return (x - mu) / jnp.sqrt(var + LN_EPS) * g + b

    x = ln(pooled, p["gi"], p["bi"])
    inter = (x @ p["w1"] + p["b1"]) @ p["w2"] + p["b2"]
    xo = ln(inter, p["go"], p["bo"])
    off = (xo @ p["wo1"] + p["bo1"]) @ p["wo2"] + p["bo2"]
    xa = ln(inter, p["ga"], p["ba"])
    act = (xa @ p["wa1"] + p["ba1"]) @ p["wa2"] + p["ba2"]
    return off, act


if __name__ == "__main__":
    key = jax.random.PRNGKey(0)
    kx, kb, kp = jax.random.split(key, 3)

    B, V, C, D, H, W = 2, 3, 3, 4, 8, 8
    x = jax.random.normal(kx, (B, V, C, D, H, W), jnp.float32)
    w_backbone = 0.05 * jax.random.normal(kb, (C * D * H * W, FEAT_DIM), jnp.float32)
    params = init_params(kp, FEAT_DIM)

    feats = synthetic_backbone(x, w_backbone)              # (B, V, F)  plain-JAX glue
    ref_off, ref_act = reference_forward(feats, params)

    # --- f32 path: strict check vs the exact (unfolded) PyTorch-math reference ---
    off32, act32, attn = mvaggregate_forward(feats, prepare_params(params, jnp.float32))
    jax.block_until_ready((off32, act32, attn))
    assert off32.shape == (B, 4) and act32.shape == (B, 8) and attn.shape == (B, V, FEAT_DIM)
    assert jnp.allclose(off32, ref_off, atol=1e-4, rtol=1e-4), \
        float(jnp.max(jnp.abs(off32 - ref_off)))
    assert jnp.allclose(act32, ref_act, atol=1e-4, rtol=1e-4), \
        float(jnp.max(jnp.abs(act32 - ref_act)))

    # --- bf16 production path: halved feats HBM traffic, native-rate MXU ---------
    offb, actb, _ = mvaggregate_forward(feats.astype(jnp.bfloat16),
                                        prepare_params(params, jnp.bfloat16))
    jax.block_until_ready((offb, actb))
    assert jnp.allclose(offb, ref_off, atol=5e-2, rtol=5e-2), \
        float(jnp.max(jnp.abs(offb - ref_off)))
    assert jnp.allclose(actb, ref_act, atol=5e-2, rtol=5e-2), \
        float(jnp.max(jnp.abs(actb - ref_act)))

    print("KERNEL_OK")
</pallas_src>

<mosaic_0001>
module attributes {stable_mosaic.version = 11 : i64} {
  func.func @mvaggregate_kernel(%arg0: i32, %arg1: memref<3x8x128xf32, #tpu.memory_space<vmem>>, %arg2: memref<2x128x256xf32, #tpu.memory_space<vmem>>, %arg3: memref<256x128xf32, #tpu.memory_space<vmem>>, %arg4: memref<4x256xf32, #tpu.memory_space<vmem>>, %arg5: memref<8x128xf32, #tpu.memory_space<vmem>>) attributes {dimension_semantics = [#tpu.dimension_semantics<parallel>], iteration_bounds = array<i64: 1>, scalar_prefetch = 0 : i64, scratch_operands = 0 : i64, tpu.core_type = #tpu.core_type<tc>, window_params = [{transform_indices = @transform_0, window_bounds = array<i64: 3, 8, 128>}, {pipeline_mode = #tpu.pipeline_mode<synchronous>, transform_indices = @transform_1, window_bounds = array<i64: 2, 128, 256>}, {pipeline_mode = #tpu.pipeline_mode<synchronous>, transform_indices = @transform_2, window_bounds = array<i64: 256, 128>}, {pipeline_mode = #tpu.pipeline_mode<synchronous>, transform_indices = @transform_3, window_bounds = array<i64: 4, 256>}, {transform_indices = @transform_4, window_bounds = array<i64: 8, 128>}]} {
    %c0 = arith.constant 0 : index
    %c0_0 = arith.constant 0 : index
    %c0_1 = arith.constant 0 : index
    %0 = vector.load %arg1[%c0, %c0_0, %c0_1] : memref<3x8x128xf32, #tpu.memory_space<vmem>>, vector<1x8x128xf32>
    %1 = vector.shape_cast %0 : vector<1x8x128xf32> to vector<8x128xf32>
    %c1 = arith.constant 1 : index
    %c0_2 = arith.constant 0 : index
    %c0_3 = arith.constant 0 : index
    %2 = vector.load %arg1[%c1, %c0_2, %c0_3] : memref<3x8x128xf32, #tpu.memory_space<vmem>>, vector<1x8x128xf32>
    %3 = vector.shape_cast %2 : vector<1x8x128xf32> to vector<8x128xf32>
    %4 = arith.maximumf %1, %3 : vector<8x128xf32>
    %c2 = arith.constant 2 : index
    %c0_4 = arith.constant 0 : index
    %c0_5 = arith.constant 0 : index
    %5 = vector.load %arg1[%c2, %c0_4, %c0_5] : memref<3x8x128xf32, #tpu.memory_space<vmem>>, vector<1x8x128xf32>
    %6 = vector.shape_cast %5 : vector<1x8x128xf32> to vector<8x128xf32>
    %7 = arith.maximumf %4, %6 : vector<8x128xf32>
    %c0_6 = arith.constant 0 : index
    %c0_7 = arith.constant 0 : index
    %8 = vector.load %arg4[%c0_6, %c0_7] : memref<4x256xf32, #tpu.memory_space<vmem>>, vector<4x256xf32>
    %c0_8 = arith.constant 0 : index
    %c0_9 = arith.constant 0 : index
    %c0_10 = arith.constant 0 : index
    %9 = vector.load %arg2[%c0_8, %c0_9, %c0_10] : memref<2x128x256xf32, #tpu.memory_space<vmem>>, vector<1x128x256xf32>
    %10 = vector.shape_cast %9 : vector<1x128x256xf32> to vector<128x256xf32>
    %cst = arith.constant dense<0.000000e+00> : vector<8xf32>
    %11 = vector.multi_reduction <add>, %7, %cst [1] : vector<8x128xf32> to vector<8xf32>
    %12 = vector.shape_cast %11 : vector<8xf32> to vector<8x1xf32>
    %13 = arith.mulf %7, %7 : vector<8x128xf32>
    %cst_11 = arith.constant dense<0.000000e+00> : vector<8xf32>
    %14 = vector.multi_reduction <add>, %13, %cst_11 [1] : vector<8x128xf32> to vector<8xf32>
    %15 = vector.shape_cast %14 : vector<8xf32> to vector<8x1xf32>
    %cst_12 = arith.constant 7.812500e-03 : f32
    %16 = vector.broadcast %cst_12 : f32 to vector<8x1xf32>
    %17 = arith.mulf %12, %16 : vector<8x1xf32>
    %cst_13 = arith.constant 7.812500e-03 : f32
    %18 = vector.broadcast %cst_13 : f32 to vector<8x1xf32>
    %19 = arith.mulf %15, %18 : vector<8x1xf32>
    %20 = arith.mulf %17, %17 : vector<8x1xf32>
    %21 = arith.subf %19, %20 : vector<8x1xf32>
    %22 = vector.broadcast %17 : vector<8x1xf32> to vector<8x128xf32>
    %23 = arith.subf %7, %22 : vector<8x128xf32>
    %cst_14 = arith.constant 9.99999974E-6 : f32
    %24 = vector.broadcast %cst_14 : f32 to vector<8x1xf32>
    %25 = arith.addf %21, %24 : vector<8x1xf32>
    %26 = math.rsqrt %25 : vector<8x1xf32>
    %27 = vector.broadcast %26 : vector<8x1xf32> to vector<8x128xf32>
    %28 = arith.mulf %23, %27 : vector<8x128xf32>
    %29 = vector.extract_strided_slice %10 {offsets = [0, 0], sizes = [128, 128], strides = [1, 1]} : vector<128x256xf32> to vector<128x128xf32>
    %cst_15 = arith.constant dense<0.000000e+00> : vector<8x128xf32>
    %30 = tpu.matmul %28, %29, %cst_15 {dimension_numbers = #tpu.dot_dimension_numbers<[1], [0], [0], [1], [0, 0, 1, 1], [], []>} : vector<8x128xf32>, vector<128x128xf32>, vector<8x128xf32> -> vector<8x128xf32>
    %31 = vector.extract_strided_slice %8 {offsets = [0, 0], sizes = [1, 128], strides = [1, 1]} : vector<4x256xf32> to vector<1x128xf32>
    %32 = vector.broadcast %31 : vector<1x128xf32> to vector<8x128xf32>
    %33 = arith.addf %30, %32 : vector<8x128xf32>
    %34 = vector.extract_strided_slice %10 {offsets = [0, 128], sizes = [128, 128], strides = [1, 1]} : vector<128x256xf32> to vector<128x128xf32>
    %cst_16 = arith.constant dense<0.000000e+00> : vector<8x128xf32>
    %35 = tpu.matmul %33, %34, %cst_16 {dimension_numbers = #tpu.dot_dimension_numbers<[1], [0], [0], [1], [0, 0, 1, 1], [], []>} : vector<8x128xf32>, vector<128x128xf32>, vector<8x128xf32> -> vector<8x128xf32>
    %36 = vector.extract_strided_slice %8 {offsets = [1, 0], sizes = [1, 128], strides = [1, 1]} : vector<4x256xf32> to vector<1x128xf32>
    %37 = vector.broadcast %36 : vector<1x128xf32> to vector<8x128xf32>
    %38 = arith.addf %35, %37 : vector<8x128xf32>
    %cst_17 = arith.constant dense<0.000000e+00> : vector<8xf32>
    %39 = vector.multi_reduction <add>, %38, %cst_17 [1] : vector<8x128xf32> to vector<8xf32>
    %40 = vector.shape_cast %39 : vector<8xf32> to vector<8x1xf32>
    %41 = arith.mulf %38, %38 : vector<8x128xf32>
    %cst_18 = arith.constant dense<0.000000e+00> : vector<8xf32>
    %42 = vector.multi_reduction <add>, %41, %cst_18 [1] : vector<8x128xf32> to vector<8xf32>
    %43 = vector.shape_cast %42 : vector<8xf32> to vector<8x1xf32>
    %cst_19 = arith.constant 7.812500e-03 : f32
    %44 = vector.broadcast %cst_19 : f32 to vector<8x1xf32>
    %45 = arith.mulf %40, %44 : vector<8x1xf32>
    %cst_20 = arith.constant 7.812500e-03 : f32
    %46 = vector.broadcast %cst_20 : f32 to vector<8x1xf32>
    %47 = arith.mulf %43, %46 : vector<8x1xf32>
    %48 = arith.mulf %45, %45 : vector<8x1xf32>
    %49 = arith.subf %47, %48 : vector<8x1xf32>
    %50 = vector.broadcast %45 : vector<8x1xf32> to vector<8x128xf32>
    %51 = arith.subf %38, %50 : vector<8x128xf32>
    %cst_21 = arith.constant 9.99999974E-6 : f32
    %52 = vector.broadcast %cst_21 : f32 to vector<8x1xf32>
    %53 = arith.addf %49, %52 : vector<8x1xf32>
    %54 = math.rsqrt %53 : vector<8x1xf32>
    %55 = vector.broadcast %54 : vector<8x1xf32> to vector<8x128xf32>
    %56 = arith.mulf %51, %55 : vector<8x128xf32>
    %c1_22 = arith.constant 1 : index
    %c0_23 = arith.constant 0 : index
    %c0_24 = arith.constant 0 : index
    %57 = vector.load %arg2[%c1_22, %c0_23, %c0_24] : memref<2x128x256xf32, #tpu.memory_space<vmem>>, vector<1x128x256xf32>
    %58 = vector.shape_cast %57 : vector<1x128x256xf32> to vector<128x256xf32>
    %cst_25 = arith.constant dense<0.000000e+00> : vector<8x256xf32>
    %59 = tpu.matmul %56, %58, %cst_25 {dimension_numbers = #tpu.dot_dimension_numbers<[1], [0], [0], [1], [0, 0, 1, 1], [], []>} : vector<8x128xf32>, vector<128x256xf32>, vector<8x256xf32> -> vector<8x256xf32>
    %60 = vector.extract_strided_slice %8 {offsets = [2, 0], sizes = [1, 256], strides = [1, 1]} : vector<4x256xf32> to vector<1x256xf32>
    %61 = vector.broadcast %60 : vector<1x256xf32> to vector<8x256xf32>
    %62 = arith.addf %59, %61 : vector<8x256xf32>
    %c0_26 = arith.constant 0 : index
    %c0_27 = arith.constant 0 : index
    %63 = vector.load %arg3[%c0_26, %c0_27] : memref<256x128xf32, #tpu.memory_space<vmem>>, vector<256x128xf32>
    %cst_28 = arith.constant dense<0.000000e+00> : vector<8x128xf32>
    %64 = tpu.matmul %62, %63, %cst_28 {dimension_numbers = #tpu.dot_dimension_numbers<[1], [0], [0], [1], [0, 0, 1, 1], [], []>} : vector<8x256xf32>, vector<256x128xf32>, vector<8x128xf32> -> vector<8x128xf32>
    %65 = vector.extract_strided_slice %8 {offsets = [3, 0], sizes = [1, 128], strides = [1, 1]} : vector<4x256xf32> to vector<1x128xf32>
    %66 = vector.broadcast %65 : vector<1x128xf32> to vector<8x128xf32>
    %67 = arith.addf %64, %66 : vector<8x128xf32>
    %c0_29 = arith.constant 0 : index
    %c0_30 = arith.constant 0 : index
    %68 = vector.load %arg5[%c0_29, %c0_30] : memref<8x128xf32, #tpu.memory_space<vmem>>, vector<8x128xf32>
    tpu.vector_store %arg5[%c0_29, %c0_30], %67 {strides = array<i32>} : memref<8x128xf32, #tpu.memory_space<vmem>>, vector<8x128xf32>,
    return
  }
  func.func @transform_0(%arg0: i32) -> (i32, i32, i32) {
    %c0_i32 = arith.constant 0 : i32
    %c0_i32_0 = arith.constant 0 : i32
    %c0_i32_1 = arith.constant 0 : i32
    return %c0_i32, %arg0, %c0_i32_0 : i32, i32, i32
  }
  func.func @transform_1(%arg0: i32) -> (i32, i32, i32) {
    %c0_i32 = arith.constant 0 : i32
    %c0_i32_0 = arith.constant 0 : i32
    %c0_i32_1 = arith.constant 0 : i32
    %c0_i32_2 = arith.constant 0 : i32
    return %c0_i32, %c0_i32_0, %c0_i32_1 : i32, i32, i32
  }
  func.func @transform_2(%arg0: i32) -> (i32, i32) {
    %c0_i32 = arith.constant 0 : i32
    %c0_i32_0 = arith.constant 0 : i32
    %c0_i32_1 = arith.constant 0 : i32
    return %c0_i32, %c0_i32_0 : i32, i32
  }
  func.func @transform_3(%arg0: i32) -> (i32, i32) {
    %c0_i32 = arith.constant 0 : i32
    %c0_i32_0 = arith.constant 0 : i32
    %c0_i32_1 = arith.constant 0 : i32
    return %c0_i32, %c0_i32_0 : i32, i32
  }
  func.func @transform_4(%arg0: i32) -> (i32, i32) {
    %c0_i32 = arith.constant 0 : i32
    %c0_i32_0 = arith.constant 0 : i32
    return %arg0, %c0_i32 : i32, i32
  }
}

module attributes {stable_mosaic.version = 11 : i64} {
  func.func @mvaggregate_kernel(%arg0: i32, %arg1: memref<3x8x128xf32, #tpu.memory_space<vmem>>, %arg2: memref<2x128x256xf32, #tpu.memory_space<vmem>>, %arg3: memref<256x128xf32, #tpu.memory_space<vmem>>, %arg4: memref<4x256xf32, #tpu.memory_space<vmem>>, %arg5: memref<8x128xf32, #tpu.memory_space<vmem>>) attributes {dimension_semantics = [#tpu.dimension_semantics<parallel>], iteration_bounds = array<i64: 1>, scalar_prefetch = 0 : i64, scratch_operands = 0 : i64, tpu.core_type = #tpu.core_type<tc>, window_params = [{transform_indices = @transform_0, window_bounds = array<i64: 3, 8, 128>}, {pipeline_mode = #tpu.pipeline_mode<synchronous>, transform_indices = @transform_1, window_bounds = array<i64: 2, 128, 256>}, {pipeline_mode = #tpu.pipeline_mode<synchronous>, transform_indices = @transform_2, window_bounds = array<i64: 256, 128>}, {pipeline_mode = #tpu.pipeline_mode<synchronous>, transform_indices = @transform_3, window_bounds = array<i64: 4, 256>}, {transform_indices = @transform_4, window_bounds = array<i64: 8, 128>}]} {
    %c0 = arith.constant 0 : index
    %c0_0 = arith.constant 0 : index
    %c0_1 = arith.constant 0 : index
    %0 = vector.load %arg1[%c0, %c0_0, %c0_1] : memref<3x8x128xf32, #tpu.memory_space<vmem>>, vector<1x8x128xf32>
    %1 = vector.shape_cast %0 : vector<1x8x128xf32> to vector<8x128xf32>
    %c1 = arith.constant 1 : index
    %c0_2 = arith.constant 0 : index
    %c0_3 = arith.constant 0 : index
    %2 = vector.load %arg1[%c1, %c0_2, %c0_3] : memref<3x8x128xf32, #tpu.memory_space<vmem>>, vector<1x8x128xf32>
    %3 = vector.shape_cast %2 : vector<1x8x128xf32> to vector<8x128xf32>
    %4 = arith.maximumf %1, %3 : vector<8x128xf32>
    %c2 = arith.constant 2 : index
    %c0_4 = arith.constant 0 : index
    %c0_5 = arith.constant 0 : index
    %5 = vector.load %arg1[%c2, %c0_4, %c0_5] : memref<3x8x128xf32, #tpu.memory_space<vmem>>, vector<1x8x128xf32>
    %6 = vector.shape_cast %5 : vector<1x8x128xf32> to vector<8x128xf32>
    %7 = arith.maximumf %4, %6 : vector<8x128xf32>
    %c0_6 = arith.constant 0 : index
    %c0_7 = arith.constant 0 : index
    %8 = vector.load %arg4[%c0_6, %c0_7] : memref<4x256xf32, #tpu.memory_space<vmem>>, vector<4x256xf32>
    %c0_8 = arith.constant 0 : index
    %c0_9 = arith.constant 0 : index
    %c0_10 = arith.constant 0 : index
    %9 = vector.load %arg2[%c0_8, %c0_9, %c0_10] : memref<2x128x256xf32, #tpu.memory_space<vmem>>, vector<1x128x256xf32>
    %10 = vector.shape_cast %9 : vector<1x128x256xf32> to vector<128x256xf32>
    %cst = arith.constant dense<0.000000e+00> : vector<8xf32>
    %11 = vector.multi_reduction <add>, %7, %cst [1] : vector<8x128xf32> to vector<8xf32>
    %12 = vector.shape_cast %11 : vector<8xf32> to vector<8x1xf32>
    %13 = arith.mulf %7, %7 : vector<8x128xf32>
    %cst_11 = arith.constant dense<0.000000e+00> : vector<8xf32>
    %14 = vector.multi_reduction <add>, %13, %cst_11 [1] : vector<8x128xf32> to vector<8xf32>
    %15 = vector.shape_cast %14 : vector<8xf32> to vector<8x1xf32>
    %cst_12 = arith.constant 7.812500e-03 : f32
    %16 = vector.broadcast %cst_12 : f32 to vector<8x1xf32>
    %17 = arith.mulf %12, %16 : vector<8x1xf32>
    %cst_13 = arith.constant 7.812500e-03 : f32
    %18 = vector.broadcast %cst_13 : f32 to vector<8x1xf32>
    %19 = arith.mulf %15, %18 : vector<8x1xf32>
    %20 = arith.mulf %17, %17 : vector<8x1xf32>
    %21 = arith.subf %19, %20 : vector<8x1xf32>
    %22 = vector.broadcast %17 : vector<8x1xf32> to vector<8x128xf32>
    %23 = arith.subf %7, %22 : vector<8x128xf32>
    %cst_14 = arith.constant 9.99999974E-6 : f32
    %24 = vector.broadcast %cst_14 : f32 to vector<8x1xf32>
    %25 = arith.addf %21, %24 : vector<8x1xf32>
    %26 = math.rsqrt %25 : vector<8x1xf32>
    %27 = vector.broadcast %26 : vector<8x1xf32> to vector<8x128xf32>
    %28 = arith.mulf %23, %27 : vector<8x128xf32>
    %29 = vector.extract_strided_slice %10 {offsets = [0, 0], sizes = [128, 128], strides = [1, 1]} : vector<128x256xf32> to vector<128x128xf32>
    %cst_15 = arith.constant dense<0.000000e+00> : vector<8x128xf32>
    %30 = tpu.matmul %28, %29, %cst_15 {dimension_numbers = #tpu.dot_dimension_numbers<[1], [0], [0], [1], [0, 0, 1, 1], [], []>} : vector<8x128xf32>, vector<128x128xf32>, vector<8x128xf32> -> vector<8x128xf32>
    %31 = vector.extract_strided_slice %8 {offsets = [0, 0], sizes = [1, 128], strides = [1, 1]} : vector<4x256xf32> to vector<1x128xf32>
    %32 = vector.broadcast %31 : vector<1x128xf32> to vector<8x128xf32>
    %33 = arith.addf %30, %32 : vector<8x128xf32>
    %34 = vector.extract_strided_slice %10 {offsets = [0, 128], sizes = [128, 128], strides = [1, 1]} : vector<128x256xf32> to vector<128x128xf32>
    %cst_16 = arith.constant dense<0.000000e+00> : vector<8x128xf32>
    %35 = tpu.matmul %33, %34, %cst_16 {dimension_numbers = #tpu.dot_dimension_numbers<[1], [0], [0], [1], [0, 0, 1, 1], [], []>} : vector<8x128xf32>, vector<128x128xf32>, vector<8x128xf32> -> vector<8x128xf32>
    %36 = vector.extract_strided_slice %8 {offsets = [1, 0], sizes = [1, 128], strides = [1, 1]} : vector<4x256xf32> to vector<1x128xf32>
    %37 = vector.broadcast %36 : vector<1x128xf32> to vector<8x128xf32>
    %38 = arith.addf %35, %37 : vector<8x128xf32>
    %cst_17 = arith.constant dense<0.000000e+00> : vector<8xf32>
    %39 = vector.multi_reduction <add>, %38, %cst_17 [1] : vector<8x128xf32> to vector<8xf32>
    %40 = vector.shape_cast %39 : vector<8xf32> to vector<8x1xf32>
    %41 = arith.mulf %38, %38 : vector<8x128xf32>
    %cst_18 = arith.constant dense<0.000000e+00> : vector<8xf32>
    %42 = vector.multi_reduction <add>, %41, %cst_18 [1] : vector<8x128xf32> to vector<8xf32>
    %43 = vector.shape_cast %42 : vector<8xf32> to vector<8x1xf32>
    %cst_19 = arith.constant 7.812500e-03 : f32
    %44 = vector.broadcast %cst_19 : f32 to vector<8x1xf32>
    %45 = arith.mulf %40, %44 : vector<8x1xf32>
    %cst_20 = arith.constant 7.812500e-03 : f32
    %46 = vector.broadcast %cst_20 : f32 to vector<8x1xf32>
    %47 = arith.mulf %43, %46 : vector<8x1xf32>
    %48 = arith.mulf %45, %45 : vector<8x1xf32>
    %49 = arith.subf %47, %48 : vector<8x1xf32>
    %50 = vector.broadcast %45 : vector<8x1xf32> to vector<8x128xf32>
    %51 = arith.subf %38, %50 : vector<8x128xf32>
    %cst_21 = arith.constant 9.99999974E-6 : f32
    %52 = vector.broadcast %cst_21 : f32 to vector<8x1xf32>
    %53 = arith.addf %49, %52 : vector<8x1xf32>
    %54 = math.rsqrt %53 : vector<8x1xf32>
    %55 = vector.broadcast %54 : vector<8x1xf32> to vector<8x128xf32>
    %56 = arith.mulf %51, %55 : vector<8x128xf32>
    %c1_22 = arith.constant 1 : index
    %c0_23 = arith.constant 0 : index
    %c0_24 = arith.constant 0 : index
    %57 = vector.load %arg2[%c1_22, %c0_23, %c0_24] : memref<2x128x256xf32, #tpu.memory_space<vmem>>, vector<1x128x256xf32>
    %58 = vector.shape_cast %57 : vector<1x128x256xf32> to vector<128x256xf32>
    %cst_25 = arith.constant dense<0.000000e+00> : vector<8x256xf32>
    %59 = tpu.matmul %56, %58, %cst_25 {dimension_numbers = #tpu.dot_dimension_numbers<[1], [0], [0], [1], [0, 0, 1, 1], [], []>} : vector<8x128xf32>, vector<128x256xf32>, vector<8x256xf32> -> vector<8x256xf32>
    %60 = vector.extract_strided_slice %8 {offsets = [2, 0], sizes = [1, 256], strides = [1, 1]} : vector<4x256xf32> to vector<1x256xf32>
    %61 = vector.broadcast %60 : vector<1x256xf32> to vector<8x256xf32>
    %62 = arith.addf %59, %61 : vector<8x256xf32>
    %c0_26 = arith.constant 0 : index
    %c0_27 = arith.constant 0 : index
    %63 = vector.load %arg3[%c0_26, %c0_27] : memref<256x128xf32, #tpu.memory_space<vmem>>, vector<256x128xf32>
    %cst_28 = arith.constant dense<0.000000e+00> : vector<8x128xf32>
    %64 = tpu.matmul %62, %63, %cst_28 {dimension_numbers = #tpu.dot_dimension_numbers<[1], [0], [0], [1], [0, 0, 1, 1], [], []>} : vector<8x256xf32>, vector<256x128xf32>, vector<8x128xf32> -> vector<8x128xf32>
    %65 = vector.extract_strided_slice %8 {offsets = [3, 0], sizes = [1, 128], strides = [1, 1]} : vector<4x256xf32> to vector<1x128xf32>
    %66 = vector.broadcast %65 : vector<1x128xf32> to vector<8x128xf32>
    %67 = arith.addf %64, %66 : vector<8x128xf32>
    %c0_29 = arith.constant 0 : index
    %c0_30 = arith.constant 0 : index
    %68 = vector.load %arg5[%c0_29, %c0_30] : memref<8x128xf32, #tpu.memory_space<vmem>>, vector<8x128xf32>
    tpu.vector_store %arg5[%c0_29, %c0_30], %67 {strides = array<i32>} : memref<8x128xf32, #tpu.memory_space<vmem>>, vector<8x128xf32>,
    return
  }
  func.func @transform_0(%arg0: i32) -> (i32, i32, i32) {
    %c0_i32 = arith.constant 0 : i32
    %c0_i32_0 = arith.constant 0 : i32
    %c0_i32_1 = arith.constant 0 : i32
    return %c0_i32, %arg0, %c0_i32_0 : i32, i32, i32
  }
  func.func @transform_1(%arg0: i32) -> (i32, i32, i32) {
    %c0_i32 = arith.constant 0 : i32
    %c0_i32_0 = arith.constant 0 : i32
    %c0_i32_1 = arith.constant 0 : i32
    %c0_i32_2 = arith.constant 0 : i32
    return %c0_i32, %c0_i32_0, %c0_i32_1 : i32, i32, i32
  }
  func.func @transform_2(%arg0: i32) -> (i32, i32) {
    %c0_i32 = arith.constant 0 : i32
    %c0_i32_0 = arith.constant 0 : i32
    %c0_i32_1 = arith.constant 0 : i32
    return %c0_i32, %c0_i32_0 : i32, i32
  }
  func.func @transform_3(%arg0: i32) -> (i32, i32) {
    %c0_i32 = arith.constant 0 : i32
    %c0_i32_0 = arith.constant 0 : i32
    %c0_i32_1 = arith.constant 0 : i32
    return %c0_i32, %c0_i32_0 : i32, i32
  }
  func.func @transform_4(%arg0: i32) -> (i32, i32) {
    %c0_i32 = arith.constant 0 : i32
    %c0_i32_0 = arith.constant 0 : i32
    return %arg0, %c0_i32 : i32, i32
  }
}

</mosaic_0001>

<llo_original>
// kernel: tpu_custom_call.1
$region0: #{tpu_custom_call.1}
  #allocation0 [shape = 'u32[]', space=smem, size = 0x4, offset = 0x4, fixed_abs, tag = 'smem constant byte address 0x4 - core index']
  #allocation1 [shape = 'u32[144,128]{1,0:T(1,128)}', space=vmem, size = 0x12000, scoped, tag = 'internal scratch']
  %s0 = inlined_call_operand.hbm [shape: f32[3,8,128], index: 0, kind: input, shape index: {}]
  %s1 = inlined_call_operand.hbm [shape: f32[2,128,256], index: 1, kind: input, shape index: {}]
  %s2 = inlined_call_operand.hbm [shape: f32[256,128], index: 2, kind: input, shape index: {}]
  %s3 = inlined_call_operand.hbm [shape: f32[4,256], index: 3, kind: input, shape index: {}]
  %s4 = inlined_call_operand.hbm [shape: f32[8,128], index: 4, kind: output, shape index: {}]
  %s5 = sld [smem:[#allocation0]]
  $region42: #{tpu_custom_call.1} parent=0
    _
  %s7 = ssub.s32 1, %s5
  %s8 = scalar_select 0, %s7, %s5
  $region1: #{tpu_custom_call.1} parent=0
    #allocation2 [shape = 'u8[12288]{0}', space=vmem, size = 0x3000, scoped, tag = 'input window, operand 0, single buffered']
    #allocation3 [shape = 's32[1]{0}', space=sflag, size = 0x4, scoped, tag = 'scoped memory for tpu_custom_call.1']
    #allocation4 [shape = 's32[1]{0}', space=sflag, size = 0x4, scoped, tag = 'scoped memory for tpu_custom_call.1']
    #allocation5 [shape = 'u8[262144]{0}', space=vmem, size = 0x40000, scoped, tag = 'input window, operand 1, single buffered']
    #allocation6 [shape = 's32[1]{0}', space=sflag, size = 0x4, scoped, tag = 'scoped memory for tpu_custom_call.1']
    #allocation7 [shape = 'u8[131072]{0}', space=vmem, size = 0x20000, scoped, tag = 'input window, operand 2, single buffered']
    #allocation8 [shape = 'u8[4096]{0}', space=vmem, size = 0x1000, scoped, tag = 'input window, operand 3, single buffered']
    #allocation9 [shape = 's32[1]{0}', space=sflag, size = 0x4, scoped, tag = 'scoped memory for tpu_custom_call.1']
    #allocation10 [shape = 'u8[4096]{0}', space=vmem, size = 0x1000, scoped, tag = 'output window, operand 0, single buffered']
    %9 = vsyncpa [#allocation3], 0
    %10 = vsyncpa [#allocation6], 0
    %11 = vsyncpa [#allocation9], 0
    %12 = vsyncpa [#allocation4], 0
    // Predicated region
    $region2: #{tpu_custom_call.1} parent=1 // pred_check
      _
    $region3: #{tpu_custom_call.1} parent=1 // pred_check_branch
      %14 = sbr.rel (0) target = $region5
    $region4: #{tpu_custom_call.1} parent=1 // pred_region
      %s16 = ssub.s32 384, 384
      %17 = vsyncadd [#allocation3], %s16
      %s18 = sshll.u32 [#allocation2], 4
      %s19 = int_to_ptr.vmem [resolvable:$true] %s18
      %24 = dma.hbm_to_vmem [thread:$0]  %s0, 384, %s19, [#allocation3], 128, 128, 8
    $region5: #{tpu_custom_call.1} parent=1 // pred_fallthru
      _
    // Predicated region
    $region6: #{tpu_custom_call.1} parent=1 // pred_check
      _
    $region7: #{tpu_custom_call.1} parent=1 // pred_check_branch
      %26 = sbr.rel (0) target = $region9
    $region8: #{tpu_custom_call.1} parent=1 // pred_region
      %s28 = ssub.s32 8192, 8192
      %29 = vsyncadd [#allocation6], %s28
      %s30 = sshll.u32 [#allocation5], 4
      %s31 = int_to_ptr.vmem [resolvable:$true] %s30
      %36 = dma.hbm_to_vmem [thread:$0]  %s1, 8192, %s31, [#allocation6], 256, 256, 16
    $region9: #{tpu_custom_call.1} parent=1 // pred_fallthru
      _
    // Predicated region
    $region10: #{tpu_custom_call.1} parent=1 // pred_check
      _
    $region11: #{tpu_custom_call.1} parent=1 // pred_check_branch
      %38 = sbr.rel (0) target = $region13
    $region12: #{tpu_custom_call.1} parent=1 // pred_region
      %s40 = ssub.s32 4096, 4096
      %41 = vsyncadd [#allocation6], %s40
      %s42 = sshll.u32 [#allocation7], 4
      %s43 = int_to_ptr.vmem [resolvable:$true] %s42
      %48 = dma.hbm_to_vmem [thread:$0]  %s2, 4096, %s43, [#allocation6], 128, 128, 8
    $region13: #{tpu_custom_call.1} parent=1 // pred_fallthru
      _
    // Predicated region
    $region14: #{tpu_custom_call.1} parent=1 // pred_check
      _
    $region15: #{tpu_custom_call.1} parent=1 // pred_check_branch
      %50 = sbr.rel (0) target = $region17
    $region16: #{tpu_custom_call.1} parent=1 // pred_region
      %s52 = ssub.s32 128, 128
      %53 = vsyncadd [#allocation9], %s52
      %s55 = sshll.u32 [#allocation8], 4
      %s56 = int_to_ptr.vmem [resolvable:$true] %s55
      %58 = dma.hbm_to_vmem [thread:$0]  %s3, 128, %s56, [#allocation9]
    $region17: #{tpu_custom_call.1} parent=1 // pred_fallthru
      _
    // Predicated region
    $region18: #{tpu_custom_call.1} parent=1 // pred_check
      _
    $region19: #{tpu_custom_call.1} parent=1 // pred_check_branch
      %60 = sbr.rel (0) target = $region21
    $region20: #{tpu_custom_call.1} parent=1 // pred_region
      %61 = dma.done [#allocation3], 384
    $region21: #{tpu_custom_call.1} parent=1 // pred_fallthru
      _
    // Predicated region
    $region22: #{tpu_custom_call.1} parent=1 // pred_check
      _
    $region23: #{tpu_custom_call.1} parent=1 // pred_check_branch
      %63 = sbr.rel (0) target = $region25
    $region24: #{tpu_custom_call.1} parent=1 // pred_region
      %64 = dma.done [#allocation6], 8192
    $region25: #{tpu_custom_call.1} parent=1 // pred_fallthru
      _
    // Predicated region
    $region26: #{tpu_custom_call.1} parent=1 // pred_check
      _
    $region27: #{tpu_custom_call.1} parent=1 // pred_check_branch
      %66 = sbr.rel (0) target = $region29
    $region28: #{tpu_custom_call.1} parent=1 // pred_region
      %67 = dma.done [#allocation6], 4096
    $region29: #{tpu_custom_call.1} parent=1 // pred_fallthru
      _
    // Predicated region
    $region30: #{tpu_custom_call.1} parent=1 // pred_check
      _
    $region31: #{tpu_custom_call.1} parent=1 // pred_check_branch
      %69 = sbr.rel (0) target = $region33
    $region32: #{tpu_custom_call.1} parent=1 // pred_region
      %70 = dma.done [#allocation9], 128
    $region33: #{tpu_custom_call.1} parent=1 // pred_fallthru
      _
    %v71 = vld [vmem:[#allocation2] sm:$0xff]
    %s72 = scalar_lea.vmem [#allocation2], 8
    %v73 = vld [vmem:[%s72] sm:$0xff]
    %v74 = vmax.f32 %v71, %v73
    %s75 = scalar_lea.vmem [#allocation2], 16
    %v76 = vld [vmem:[%s75] sm:$0xff]
    %v77 = vmax.f32 %v74, %v76
    %v78 = vld [vmem:[#allocation8] sm:$0xff]
    %v79 = vld [vmem:[#allocation5] sm:$0xff]
    %v80 = vld [vmem:[#allocation5 + $0x8] sm:$0xff]
    %v81 = vld [vmem:[#allocation5 + $0x10] sm:$0xff]
    %v82 = vld [vmem:[#allocation5 + $0x18] sm:$0xff]
    %v83 = vld [vmem:[#allocation5 + $0x20] sm:$0xff]
    %v84 = vld [vmem:[#allocation5 + $0x28] sm:$0xff]
    %v85 = vld [vmem:[#allocation5 + $0x30] sm:$0xff]
    %v86 = vld [vmem:[#allocation5 + $0x38] sm:$0xff]
    %v87 = vld [vmem:[#allocation5 + $0x40] sm:$0xff]
    %v88 = vld [vmem:[#allocation5 + $0x48] sm:$0xff]
    %v89 = vld [vmem:[#allocation5 + $0x50] sm:$0xff]
    %v90 = vld [vmem:[#allocation5 + $0x58] sm:$0xff]
    %v91 = vld [vmem:[#allocation5 + $0x60] sm:$0xff]
    %v92 = vld [vmem:[#allocation5 + $0x68] sm:$0xff]
    %v93 = vld [vmem:[#allocation5 + $0x70] sm:$0xff]
    %v94 = vld [vmem:[#allocation5 + $0x78] sm:$0xff]
    %v95 = vld [vmem:[#allocation5 + $0x80] sm:$0xff]
    %v96 = vld [vmem:[#allocation5 + $0x88] sm:$0xff]
    %v97 = vld [vmem:[#allocation5 + $0x90] sm:$0xff]
    %v98 = vld [vmem:[#allocation5 + $0x98] sm:$0xff]
    %v99 = vld [vmem:[#allocation5 + $0xa0] sm:$0xff]
    %v100 = vld [vmem:[#allocation5 + $0xa8] sm:$0xff]
    %v101 = vld [vmem:[#allocation5 + $0xb0] sm:$0xff]
    %v102 = vld [vmem:[#allocation5 + $0xb8] sm:$0xff]
    %v103 = vld [vmem:[#allocation5 + $0xc0] sm:$0xff]
    %v104 = vld [vmem:[#allocation5 + $0xc8] sm:$0xff]
    %v105 = vld [vmem:[#allocation5 + $0xd0] sm:$0xff]
    %v106 = vld [vmem:[#allocation5 + $0xd8] sm:$0xff]
    %v107 = vld [vmem:[#allocation5 + $0xe0] sm:$0xff]
    %v108 = vld [vmem:[#allocation5 + $0xe8] sm:$0xff]
    %v109 = vld [vmem:[#allocation5 + $0xf0] sm:$0xff]
    %v110 = vld [vmem:[#allocation5 + $0xf8] sm:$0xff]
    %111 = vadd.xlane.f32.xlu0 %v77
    %v112 = vpop.xlane.xlu0 %111
    %v113 = vmul.f32 %v77, %v77
    %114 = vadd.xlane.f32.xlu0 %v113
    %v115 = vpop.xlane.xlu0 %114
    %v116 = vmul.f32 %v112, 0.0078125
    %v117 = vmul.f32 %v115, 0.0078125
    %v118 = vmul.f32 %v116, %v116
    %v119 = vsub.f32 %v117, %v118
    %v120 = vsub.f32 %v77, %v116
    %v121 = vadd.f32 %v119, 1e-05
    %v122 = vrsqrt.pop %v121
    %v123 = vmul.f32 %v120, %v122
    %v124 = vlaneseq
    %v125 = vshrl.u32 %v124, 7
    %v126 = vsub.s32 0, %v125
    %v127 = vrot.slane %v78, %v126
    %128 = vmatprep.subr.mxu0 0.0
    %129 = vmatpush1.msra.mxu0 %v109
    %130 = vmatprep.subr.mxu0 0.0
    %131 = vmatpush1.msra.mxu0 %v107
    %132 = vmatprep.subr.mxu0 0.0
    %133 = vmatpush1.msra.mxu0 %v105
    %134 = vmatprep.subr.mxu0 0.0
    %135 = vmatpush1.msra.mxu0 %v103
    %136 = vmatprep.subr.mxu0 0.0
    %137 = vmatpush1.msra.mxu0 %v101
    %138 = vmatprep.subr.mxu0 0.0
    %139 = vmatpush1.msra.mxu0 %v99
    %140 = vmatprep.subr.mxu0 0.0
    %141 = vmatpush1.msra.mxu0 %v97
    %142 = vmatprep.subr.mxu0 0.0
    %143 = vmatpush1.msra.mxu0 %v95
    %144 = vmatprep.subr.mxu0 0.0
    %145 = vmatpush1.msra.mxu0 %v93
    %146 = vmatprep.subr.mxu0 0.0
    %147 = vmatpush1.msra.mxu0 %v91
    %148 = vmatprep.subr.mxu0 0.0
    %149 = vmatpush1.msra.mxu0 %v89
    %150 = vmatprep.subr.mxu0 0.0
    %151 = vmatpush1.msra.mxu0 %v87
    %152 = vmatprep.subr.mxu0 0.0
    %153 = vmatpush1.msra.mxu0 %v85
    %154 = vmatprep.subr.mxu0 0.0
    %155 = vmatpush1.msra.mxu0 %v83
    %156 = vmatprep.subr.mxu0 0.0
    %157 = vmatpush1.msra.mxu0 %v81
    %158 = vmatprep.subr.mxu0 0.0
    %159 = vmatpush1.msra.mxu0 %v79
    %160 = vmatprep.subr.mxu0 0.0
    %161 = vmatpush2.msra.mxu0 0.0
    %162 = vmatprep.subr.mxu0 0.0
    %163 = vmatpush2.msra.mxu0 0.0
    %164 = vmatprep.subr.mxu0 0.0
    %165 = vmatpush2.msra.mxu0 0.0
    %166 = vmatprep.subr.mxu0 0.0
    %167 = vmatpush2.msra.mxu0 0.0
    %168 = vmatprep.subr.mxu0 0.0
    %169 = vmatpush2.msra.mxu0 0.0
    %170 = vmatprep.subr.mxu0 0.0
    %171 = vmatpush2.msra.mxu0 0.0
    %172 = vmatprep.subr.mxu0 0.0
    %173 = vmatpush2.msra.mxu0 0.0
    %174 = vmatprep.subr.mxu0 0.0
    %175 = vmatpush2.msra.mxu0 0.0
    %176 = vmatprep.subr.mxu0 0.0
    %177 = vmatpush2.msra.mxu0 0.0
    %178 = vmatprep.subr.mxu0 0.0
    %179 = vmatpush2.msra.mxu0 0.0
    %180 = vmatprep.subr.mxu0 0.0
    %181 = vmatpush2.msra.mxu0 0.0
    %182 = vmatprep.subr.mxu0 0.0
    %183 = vmatpush2.msra.mxu0 0.0
    %184 = vmatprep.subr.mxu0 0.0
    %185 = vmatpush2.msra.mxu0 0.0
    %186 = vmatprep.subr.mxu0 0.0
    %187 = vmatpush2.msra.mxu0 0.0
    %188 = vmatprep.subr.mxu0 0.0
    %189 = vmatpush2.msra.mxu0 0.0
    %190 = vmatprep.subr.mxu0 0.0
    %191 = vmatpush2.msra.mxu0 0.0
    %192 = vmatprep.mubr.f32.mxu0 0.0
    %193 = vmatmul.mubr.f32.gmra.mxu0 %v123
    %v194 = vpop.f32.mrf.mxu0
    %v195 = vadd.f32 %v127, %v194
    %v196 = vpop.f32.mrf.mxu0
    %197 = vdwg.mxu0
    %v198 = vlaneseq
    %v199 = vshrl.u32 %v198, 7
    %v200 = vsub.s32 1, %v199
    %v201 = vrot.slane %v78, %v200
    %202 = vmatprep.subr.mxu0 0.0
    %203 = vmatpush1.msra.mxu0 %v110
    %204 = vmatprep.subr.mxu0 0.0
    %205 = vmatpush1.msra.mxu0 %v108
    %206 = vmatprep.subr.mxu0 0.0
    %207 = vmatpush1.msra.mxu0 %v106
    %208 = vmatprep.subr.mxu0 0.0
    %209 = vmatpush1.msra.mxu0 %v104
    %210 = vmatprep.subr.mxu0 0.0
    %211 = vmatpush1.msra.mxu0 %v102
    %212 = vmatprep.subr.mxu0 0.0
    %213 = vmatpush1.msra.mxu0 %v100
    %214 = vmatprep.subr.mxu0 0.0
    %215 = vmatpush1.msra.mxu0 %v98
    %216 = vmatprep.subr.mxu0 0.0
    %217 = vmatpush1.msra.mxu0 %v96
    %218 = vmatprep.subr.mxu0 0.0
    %219 = vmatpush1.msra.mxu0 %v94
    %220 = vmatprep.subr.mxu0 0.0
    %221 = vmatpush1.msra.mxu0 %v92
    %222 = vmatprep.subr.mxu0 0.0
    %223 = vmatpush1.msra.mxu0 %v90
    %224 = vmatprep.subr.mxu0 0.0
    %225 = vmatpush1.msra.mxu0 %v88
    %226 = vmatprep.subr.mxu0 0.0
    %227 = vmatpush1.msra.mxu0 %v86
    %228 = vmatprep.subr.mxu0 0.0
    %229 = vmatpush1.msra.mxu0 %v84
    %230 = vmatprep.subr.mxu0 0.0
    %231 = vmatpush1.msra.mxu0 %v82
    %232 = vmatprep.subr.mxu0 0.0
    %233 = vmatpush1.msra.mxu0 %v80
    %234 = vmatprep.subr.mxu0 0.0
    %235 = vmatpush2.msra.mxu0 0.0
    %236 = vmatprep.subr.mxu0 0.0
    %237 = vmatpush2.msra.mxu0 0.0
    %238 = vmatprep.subr.mxu0 0.0
    %239 = vmatpush2.msra.mxu0 0.0
    %240 = vmatprep.subr.mxu0 0.0
    %241 = vmatpush2.msra.mxu0 0.0
    %242 = vmatprep.subr.mxu0 0.0
    %243 = vmatpush2.msra.mxu0 0.0
    %244 = vmatprep.subr.mxu0 0.0
    %245 = vmatpush2.msra.mxu0 0.0
    %246 = vmatprep.subr.mxu0 0.0
    %247 = vmatpush2.msra.mxu0 0.0
    %248 = vmatprep.subr.mxu0 0.0
    %249 = vmatpush2.msra.mxu0 0.0
    %250 = vmatprep.subr.mxu0 0.0
    %251 = vmatpush2.msra.mxu0 0.0
    %252 = vmatprep.subr.mxu0 0.0
    %253 = vmatpush2.msra.mxu0 0.0
    %254 = vmatprep.subr.mxu0 0.0
    %255 = vmatpush2.msra.mxu0 0.0
    %256 = vmatprep.subr.mxu0 0.0
    %257 = vmatpush2.msra.mxu0 0.0
    %258 = vmatprep.subr.mxu0 0.0
    %259 = vmatpush2.msra.mxu0 0.0
    %260 = vmatprep.subr.mxu0 0.0
    %261 = vmatpush2.msra.mxu0 0.0
    %262 = vmatprep.subr.mxu0 0.0
    %263 = vmatpush2.msra.mxu0 0.0
    %264 = vmatprep.subr.mxu0 0.0
    %265 = vmatpush2.msra.mxu0 0.0
    %266 = vmatprep.mubr.f32.mxu0 0.0
    %267 = vmatmul.mubr.f32.gmra.mxu0 %v195
    %v268 = vpop.f32.mrf.mxu0
    %v269 = vadd.f32 %v201, %v268
    %v270 = vpop.f32.mrf.mxu0
    %271 = vdwg.mxu0
    %272 = vadd.xlane.f32.xlu0 %v269
    %v273 = vpop.xlane.xlu0 %272
    %v274 = vmul.f32 %v269, %v269
    %275 = vadd.xlane.f32.xlu0 %v274
    %v276 = vpop.xlane.xlu0 %275
    %v277 = vmul.f32 %v273, 0.0078125
    %v278 = vmul.f32 %v276, 0.0078125
    %v279 = vmul.f32 %v277, %v277
    %v280 = vsub.f32 %v278, %v279
    %v281 = vsub.f32 %v269, %v277
    %v282 = vadd.f32 %v280, 1e-05
    %v283 = vrsqrt.pop %v282
    %v284 = vmul.f32 %v281, %v283
    %s285 = scalar_lea.vmem [#allocation5], 256
    %v286 = vld [vmem:[%s285] sm:$0xff]
    %v287 = vld [vmem:[%s285 + $0x8] sm:$0xff]
    %v288 = vld [vmem:[%s285 + $0x10] sm:$0xff]
    %v289 = vld [vmem:[%s285 + $0x18] sm:$0xff]
    %v290 = vld [vmem:[%s285 + $0x20] sm:$0xff]
    %v291 = vld [vmem:[%s285 + $0x28] sm:$0xff]
    %v292 = vld [vmem:[%s285 + $0x30] sm:$0xff]
    %v293 = vld [vmem:[%s285 + $0x38] sm:$0xff]
    %v294 = vld [vmem:[%s285 + $0x40] sm:$0xff]
    %v295 = vld [vmem:[%s285 + $0x48] sm:$0xff]
    %v296 = vld [vmem:[%s285 + $0x50] sm:$0xff]
    %v297 = vld [vmem:[%s285 + $0x58] sm:$0xff]
    %v298 = vld [vmem:[%s285 + $0x60] sm:$0xff]
    %v299 = vld [vmem:[%s285 + $0x68] sm:$0xff]
    %v300 = vld [vmem:[%s285 + $0x70] sm:$0xff]
    %v301 = vld [vmem:[%s285 + $0x78] sm:$0xff]
    %v302 = vld [vmem:[%s285 + $0x80] sm:$0xff]
    %v303 = vld [vmem:[%s285 + $0x88] sm:$0xff]
    %v304 = vld [vmem:[%s285 + $0x90] sm:$0xff]
    %v305 = vld [vmem:[%s285 + $0x98] sm:$0xff]
    %v306 = vld [vmem:[%s285 + $0xa0] sm:$0xff]
    %v307 = vld [vmem:[%s285 + $0xa8] sm:$0xff]
    %v308 = vld [vmem:[%s285 + $0xb0] sm:$0xff]
    %v309 = vld [vmem:[%s285 + $0xb8] sm:$0xff]
    %v310 = vld [vmem:[%s285 + $0xc0] sm:$0xff]
    %v311 = vld [vmem:[%s285 + $0xc8] sm:$0xff]
    %v312 = vld [vmem:[%s285 + $0xd0] sm:$0xff]
    %v313 = vld [vmem:[%s285 + $0xd8] sm:$0xff]
    %v314 = vld [vmem:[%s285 + $0xe0] sm:$0xff]
    %v315 = vld [vmem:[%s285 + $0xe8] sm:$0xff]
    %v316 = vld [vmem:[%s285 + $0xf0] sm:$0xff]
    %v317 = vld [vmem:[%s285 + $0xf8] sm:$0xff]
    %v319 = vlaneseq
    %v320 = vshrl.u32 %v319, 7
    %v321 = vsub.s32 2, %v320
    %v322 = vrot.slane %v78, %v321
    %v323 = vlaneseq
    %v324 = vshrl.u32 %v323, 7
    %v325 = vsub.s32 6, %v324
    %v326 = vrot.slane %v78, %v325
    %v329 = vlaneseq
    %v330 = vshrl.u32 %v329, 7
    %v331 = vsub.s32 2, %v330
    %v332 = vrot.slane %v322, %v331
    %v333 = vlaneseq
    %v334 = vshrl.u32 %v333, 7
    %v335 = vsub.s32 2, %v334
    %v336 = vrot.slane %v326, %v335
    %337 = vmatprep.subr.mxu0 %v317
    %338 = vmatpush1.msra.mxu0 %v316
    %339 = vmatprep.subr.mxu0 %v315
    %340 = vmatpush1.msra.mxu0 %v314
    %341 = vmatprep.subr.mxu0 %v313
    %342 = vmatpush1.msra.mxu0 %v312
    %343 = vmatprep.subr.mxu0 %v311
    %344 = vmatpush1.msra.mxu0 %v310
    %345 = vmatprep.subr.mxu0 %v309
    %346 = vmatpush1.msra.mxu0 %v308
    %347 = vmatprep.subr.mxu0 %v307
    %348 = vmatpush1.msra.mxu0 %v306
    %349 = vmatprep.subr.mxu0 %v305
    %350 = vmatpush1.msra.mxu0 %v304
    %351 = vmatprep.subr.mxu0 %v303
    %352 = vmatpush1.msra.mxu0 %v302
    %353 = vmatprep.subr.mxu0 %v301
    %354 = vmatpush1.msra.mxu0 %v300
    %355 = vmatprep.subr.mxu0 %v299
    %356 = vmatpush1.msra.mxu0 %v298
    %357 = vmatprep.subr.mxu0 %v297
    %358 = vmatpush1.msra.mxu0 %v296
    %359 = vmatprep.subr.mxu0 %v295
    %360 = vmatpush1.msra.mxu0 %v294
    %361 = vmatprep.subr.mxu0 %v293
    %362 = vmatpush1.msra.mxu0 %v292
    %363 = vmatprep.subr.mxu0 %v291
    %364 = vmatpush1.msra.mxu0 %v290
    %365 = vmatprep.subr.mxu0 %v289
    %366 = vmatpush1.msra.mxu0 %v288
    %367 = vmatprep.subr.mxu0 %v287
    %368 = vmatpush1.msra.mxu0 %v286
    %369 = vmatprep.subr.mxu0 0.0
    %370 = vmatpush2.msra.mxu0 0.0
    %371 = vmatprep.subr.mxu0 0.0
    %372 = vmatpush2.msra.mxu0 0.0
    %373 = vmatprep.subr.mxu0 0.0
    %374 = vmatpush2.msra.mxu0 0.0
    %375 = vmatprep.subr.mxu0 0.0
    %376 = vmatpush2.msra.mxu0 0.0
    %377 = vmatprep.subr.mxu0 0.0
    %378 = vmatpush2.msra.mxu0 0.0
    %379 = vmatprep.subr.mxu0 0.0
    %380 = vmatpush2.msra.mxu0 0.0
    %381 = vmatprep.subr.mxu0 0.0
    %382 = vmatpush2.msra.mxu0 0.0
    %383 = vmatprep.subr.mxu0 0.0
    %384 = vmatpush2.msra.mxu0 0.0
    %385 = vmatprep.subr.mxu0 0.0
    %386 = vmatpush2.msra.mxu0 0.0
    %387 = vmatprep.subr.mxu0 0.0
    %388 = vmatpush2.msra.mxu0 0.0
    %389 = vmatprep.subr.mxu0 0.0
    %390 = vmatpush2.msra.mxu0 0.0
    %391 = vmatprep.subr.mxu0 0.0
    %392 = vmatpush2.msra.mxu0 0.0
    %393 = vmatprep.subr.mxu0 0.0
    %394 = vmatpush2.msra.mxu0 0.0
    %395 = vmatprep.subr.mxu0 0.0
    %396 = vmatpush2.msra.mxu0 0.0
    %397 = vmatprep.subr.mxu0 0.0
    %398 = vmatpush2.msra.mxu0 0.0
    %399 = vmatprep.subr.mxu0 0.0
    %400 = vmatpush2.msra.mxu0 0.0
    %401 = vmatprep.mubr.f32.mxu0 0.0
    %402 = vmatmul.mubr.f32.gmra.mxu0 %v284
    %v403 = vpop.f32.mrf.mxu0
    %v404 = vadd.f32 %v332, %v403
    %v405 = vpop.f32.mrf.mxu0
    %v406 = vadd.f32 %v336, %v405
    %407 = vdwg.mxu0
    %v408 = vld [vmem:[#allocation7] sm:$0xff]
    %v409 = vld [vmem:[#allocation7 + $0x8] sm:$0xff]
    %v410 = vld [vmem:[#allocation7 + $0x10] sm:$0xff]
    %v411 = vld [vmem:[#allocation7 + $0x18] sm:$0xff]
    %v412 = vld [vmem:[#allocation7 + $0x20] sm:$0xff]
    %v413 = vld [vmem:[#allocation7 + $0x28] sm:$0xff]
    %v414 = vld [vmem:[#allocation7 + $0x30] sm:$0xff]
    %v415 = vld [vmem:[#allocation7 + $0x38] sm:$0xff]
    %v416 = vld [vmem:[#allocation7 + $0x40] sm:$0xff]
    %v417 = vld [vmem:[#allocation7 + $0x48] sm:$0xff]
    %v418 = vld [vmem:[#allocation7 + $0x50] sm:$0xff]
    %v419 = vld [vmem:[#allocation7 + $0x58] sm:$0xff]
    %v420 = vld [vmem:[#allocation7 + $0x60] sm:$0xff]
    %v421 = vld [vmem:[#allocation7 + $0x68] sm:$0xff]
    %v422 = vld [vmem:[#allocation7 + $0x70] sm:$0xff]
    %v423 = vld [vmem:[#allocation7 + $0x78] sm:$0xff]
    %v424 = vld [vmem:[#allocation7 + $0x80] sm:$0xff]
    %v425 = vld [vmem:[#allocation7 + $0x88] sm:$0xff]
    %v426 = vld [vmem:[#allocation7 + $0x90] sm:$0xff]
    %v427 = vld [vmem:[#allocation7 + $0x98] sm:$0xff]
    %v428 = vld [vmem:[#allocation7 + $0xa0] sm:$0xff]
    %v429 = vld [vmem:[#allocation7 + $0xa8] sm:$0xff]
    %v430 = vld [vmem:[#allocation7 + $0xb0] sm:$0xff]
    %v431 = vld [vmem:[#allocation7 + $0xb8] sm:$0xff]
    %v432 = vld [vmem:[#allocation7 + $0xc0] sm:$0xff]
    %v433 = vld [vmem:[#allocation7 + $0xc8] sm:$0xff]
    %v434 = vld [vmem:[#allocation7 + $0xd0] sm:$0xff]
    %v435 = vld [vmem:[#allocation7 + $0xd8] sm:$0xff]
    %v436 = vld [vmem:[#allocation7 + $0xe0] sm:$0xff]
    %v437 = vld [vmem:[#allocation7 + $0xe8] sm:$0xff]
    %v438 = vld [vmem:[#allocation7 + $0xf0] sm:$0xff]
    %v439 = vld [vmem:[#allocation7 + $0xf8] sm:$0xff]
    %v440 = vlaneseq
    %v441 = vshrl.u32 %v440, 7
    %v442 = vsub.s32 3, %v441
    %v443 = vrot.slane %v78, %v442
    %444 = vmatprep.subr.mxu0 0.0
    %445 = vmatpush1.msra.mxu0 %v423
    %446 = vmatprep.subr.mxu0 0.0
    %447 = vmatpush1.msra.mxu0 %v422
    %448 = vmatprep.subr.mxu0 0.0
    %449 = vmatpush1.msra.mxu0 %v421
    %450 = vmatprep.subr.mxu0 0.0
    %451 = vmatpush1.msra.mxu0 %v420
    %452 = vmatprep.subr.mxu0 0.0
    %453 = vmatpush1.msra.mxu0 %v419
    %454 = vmatprep.subr.mxu0 0.0
    %455 = vmatpush1.msra.mxu0 %v418
    %456 = vmatprep.subr.mxu0 0.0
    %457 = vmatpush1.msra.mxu0 %v417
    %458 = vmatprep.subr.mxu0 0.0
    %459 = vmatpush1.msra.mxu0 %v416
    %460 = vmatprep.subr.mxu0 0.0
    %461 = vmatpush1.msra.mxu0 %v415
    %462 = vmatprep.subr.mxu0 0.0
    %463 = vmatpush1.msra.mxu0 %v414
    %464 = vmatprep.subr.mxu0 0.0
    %465 = vmatpush1.msra.mxu0 %v413
    %466 = vmatprep.subr.mxu0 0.0
    %467 = vmatpush1.msra.mxu0 %v412
    %468 = vmatprep.subr.mxu0 0.0
    %469 = vmatpush1.msra.mxu0 %v411
    %470 = vmatprep.subr.mxu0 0.0
    %471 = vmatpush1.msra.mxu0 %v410
    %472 = vmatprep.subr.mxu0 0.0
    %473 = vmatpush1.msra.mxu0 %v409
    %474 = vmatprep.subr.mxu0 0.0
    %475 = vmatpush1.msra.mxu0 %v408
    %476 = vmatprep.subr.mxu0 0.0
    %477 = vmatpush2.msra.mxu0 %v439
    %478 = vmatprep.subr.mxu0 0.0
    %479 = vmatpush2.msra.mxu0 %v438
    %480 = vmatprep.subr.mxu0 0.0
    %481 = vmatpush2.msra.mxu0 %v437
    %482 = vmatprep.subr.mxu0 0.0
    %483 = vmatpush2.msra.mxu0 %v436
    %484 = vmatprep.subr.mxu0 0.0
    %485 = vmatpush2.msra.mxu0 %v435
    %486 = vmatprep.subr.mxu0 0.0
    %487 = vmatpush2.msra.mxu0 %v434
    %488 = vmatprep.subr.mxu0 0.0
    %489 = vmatpush2.msra.mxu0 %v433
    %490 = vmatprep.subr.mxu0 0.0
    %491 = vmatpush2.msra.mxu0 %v432
    %492 = vmatprep.subr.mxu0 0.0
    %493 = vmatpush2.msra.mxu0 %v431
    %494 = vmatprep.subr.mxu0 0.0
    %495 = vmatpush2.msra.mxu0 %v430
    %496 = vmatprep.subr.mxu0 0.0
    %497 = vmatpush2.msra.mxu0 %v429
    %498 = vmatprep.subr.mxu0 0.0
    %499 = vmatpush2.msra.mxu0 %v428
    %500 = vmatprep.subr.mxu0 0.0
    %501 = vmatpush2.msra.mxu0 %v427
    %502 = vmatprep.subr.mxu0 0.0
    %503 = vmatpush2.msra.mxu0 %v426
    %504 = vmatprep.subr.mxu0 0.0
    %505 = vmatpush2.msra.mxu0 %v425
    %506 = vmatprep.subr.mxu0 0.0
    %507 = vmatpush2.msra.mxu0 %v424
    %508 = vmatprep.mubr.f32.mxu0 %v406
    %509 = vmatmul.mubr.f32.gmra.mxu0 %v404
    %v510 = vpop.f32.mrf.mxu0
    %v511 = vadd.f32 %v443, %v510
    %v512 = vpop.f32.mrf.mxu0
    %513 = vdwg.mxu0
    %514 = vst [vmem:[#allocation10] sm:$0xff] %v511
    // Predicated region
    $region34: #{tpu_custom_call.1} parent=1 // pred_check
      _
    $region35: #{tpu_custom_call.1} parent=1 // pred_check_branch
      %516 = sbr.rel (0) target = $region37
    $region36: #{tpu_custom_call.1} parent=1 // pred_region
      %s518 = ssub.s32 128, 128
      %519 = vsyncadd [#allocation4], %s518
      %s521 = sshll.u32 [#allocation10], 4
      %s522 = int_to_ptr.vmem [resolvable:$true] %s521
      %524 = dma.vmem_to_hbm [thread:$0]  %s522, 128, %s4, [#allocation4]
    $region37: #{tpu_custom_call.1} parent=1 // pred_fallthru
      _
    // Predicated region
    $region38: #{tpu_custom_call.1} parent=1 // pred_check
      _
    $region39: #{tpu_custom_call.1} parent=1 // pred_check_branch
      %526 = sbr.rel (0) target = $region41
    $region40: #{tpu_custom_call.1} parent=1 // pred_region
      %527 = dma.done [#allocation4], 128
    $region41: #{tpu_custom_call.1} parent=1 // pred_fallthru
      _
    %528 = vsyncpa [#allocation3], 1
    %529 = vsyncpa [#allocation6], 1
    %530 = vsyncpa [#allocation9], 1
    %531 = vsyncpa [#allocation4], 1

// kernel: tpu_custom_call.1
$region0: #{tpu_custom_call.1}
  #allocation0 [shape = 'u32[]', space=smem, size = 0x4, offset = 0x4, fixed_abs, tag = 'smem constant byte address 0x4 - core index']
  #allocation1 [shape = 'u32[144,128]{1,0:T(1,128)}', space=vmem, size = 0x12000, scoped, tag = 'internal scratch']
  %s0 = inlined_call_operand.hbm [shape: f32[3,8,128], index: 0, kind: input, shape index: {}]
  %s1 = inlined_call_operand.hbm [shape: f32[2,128,256], index: 1, kind: input, shape index: {}]
  %s2 = inlined_call_operand.hbm [shape: f32[256,128], index: 2, kind: input, shape index: {}]
  %s3 = inlined_call_operand.hbm [shape: f32[4,256], index: 3, kind: input, shape index: {}]
  %s4 = inlined_call_operand.hbm [shape: f32[8,128], index: 4, kind: output, shape index: {}]
  %s5 = sld [smem:[#allocation0]]
  $region42: #{tpu_custom_call.1} parent=0
    _
  %s7 = ssub.s32 1, %s5
  %s8 = scalar_select 0, %s7, %s5
  $region1: #{tpu_custom_call.1} parent=0
    #allocation2 [shape = 'u8[12288]{0}', space=vmem, size = 0x3000, scoped, tag = 'input window, operand 0, single buffered']
    #allocation3 [shape = 's32[1]{0}', space=sflag, size = 0x4, scoped, tag = 'scoped memory for tpu_custom_call.1']
    #allocation4 [shape = 's32[1]{0}', space=sflag, size = 0x4, scoped, tag = 'scoped memory for tpu_custom_call.1']
    #allocation5 [shape = 'u8[262144]{0}', space=vmem, size = 0x40000, scoped, tag = 'input window, operand 1, single buffered']
    #allocation6 [shape = 's32[1]{0}', space=sflag, size = 0x4, scoped, tag = 'scoped memory for tpu_custom_call.1']
    #allocation7 [shape = 'u8[131072]{0}', space=vmem, size = 0x20000, scoped, tag = 'input window, operand 2, single buffered']
    #allocation8 [shape = 'u8[4096]{0}', space=vmem, size = 0x1000, scoped, tag = 'input window, operand 3, single buffered']
    #allocation9 [shape = 's32[1]{0}', space=sflag, size = 0x4, scoped, tag = 'scoped memory for tpu_custom_call.1']
    #allocation10 [shape = 'u8[4096]{0}', space=vmem, size = 0x1000, scoped, tag = 'output window, operand 0, single buffered']
    %9 = vsyncpa [#allocation3], 0
    %10 = vsyncpa [#allocation6], 0
    %11 = vsyncpa [#allocation9], 0
    %12 = vsyncpa [#allocation4], 0
    // Predicated region
    $region2: #{tpu_custom_call.1} parent=1 // pred_check
      _
    $region3: #{tpu_custom_call.1} parent=1 // pred_check_branch
      %14 = sbr.rel (0) target = $region5
    $region4: #{tpu_custom_call.1} parent=1 // pred_region
      %s16 = ssub.s32 384, 384
      %17 = vsyncadd [#allocation3], %s16
      %s18 = sshll.u32 [#allocation2], 4
      %s19 = int_to_ptr.vmem [resolvable:$true] %s18
      %24 = dma.hbm_to_vmem [thread:$0]  %s0, 384, %s19, [#allocation3], 128, 128, 8
    $region5: #{tpu_custom_call.1} parent=1 // pred_fallthru
      _
    // Predicated region
    $region6: #{tpu_custom_call.1} parent=1 // pred_check
      _
    $region7: #{tpu_custom_call.1} parent=1 // pred_check_branch
      %26 = sbr.rel (0) target = $region9
    $region8: #{tpu_custom_call.1} parent=1 // pred_region
      %s28 = ssub.s32 8192, 8192
      %29 = vsyncadd [#allocation6], %s28
      %s30 = sshll.u32 [#allocation5], 4
      %s31 = int_to_ptr.vmem [resolvable:$true] %s30
      %36 = dma.hbm_to_vmem [thread:$0]  %s1, 8192, %s31, [#allocation6], 256, 256, 16
    $region9: #{tpu_custom_call.1} parent=1 // pred_fallthru
      _
    // Predicated region
    $region10: #{tpu_custom_call.1} parent=1 // pred_check
      _
    $region11: #{tpu_custom_call.1} parent=1 // pred_check_branch
      %38 = sbr.rel (0) target = $region13
    $region12: #{tpu_custom_call.1} parent=1 // pred_region
      %s40 = ssub.s32 4096, 4096
      %41 = vsyncadd [#allocation6], %s40
      %s42 = sshll.u32 [#allocation7], 4
      %s43 = int_to_ptr.vmem [resolvable:$true] %s42
      %48 = dma.hbm_to_vmem [thread:$0]  %s2, 4096, %s43, [#allocation6], 128, 128, 8
    $region13: #{tpu_custom_call.1} parent=1 // pred_fallthru
      _
    // Predicated region
    $region14: #{tpu_custom_call.1} parent=1 // pred_check
      _
    $region15: #{tpu_custom_call.1} parent=1 // pred_check_branch
      %50 = sbr.rel (0) target = $region17
    $region16: #{tpu_custom_call.1} parent=1 // pred_region
      %s52 = ssub.s32 128, 128
      %53 = vsyncadd [#allocation9], %s52
      %s55 = sshll.u32 [#allocation8], 4
      %s56 = int_to_ptr.vmem [resolvable:$true] %s55
      %58 = dma.hbm_to_vmem [thread:$0]  %s3, 128, %s56, [#allocation9]
    $region17: #{tpu_custom_call.1} parent=1 // pred_fallthru
      _
    // Predicated region
    $region18: #{tpu_custom_call.1} parent=1 // pred_check
      _
    $region19: #{tpu_custom_call.1} parent=1 // pred_check_branch
      %60 = sbr.rel (0) target = $region21
    $region20: #{tpu_custom_call.1} parent=1 // pred_region
      %61 = dma.done [#allocation3], 384
    $region21: #{tpu_custom_call.1} parent=1 // pred_fallthru
      _
    // Predicated region
    $region22: #{tpu_custom_call.1} parent=1 // pred_check
      _
    $region23: #{tpu_custom_call.1} parent=1 // pred_check_branch
      %63 = sbr.rel (0) target = $region25
    $region24: #{tpu_custom_call.1} parent=1 // pred_region
      %64 = dma.done [#allocation6], 8192
    $region25: #{tpu_custom_call.1} parent=1 // pred_fallthru
      _
    // Predicated region
    $region26: #{tpu_custom_call.1} parent=1 // pred_check
      _
    $region27: #{tpu_custom_call.1} parent=1 // pred_check_branch
      %66 = sbr.rel (0) target = $region29
    $region28: #{tpu_custom_call.1} parent=1 // pred_region
      %67 = dma.done [#allocation6], 4096
    $region29: #{tpu_custom_call.1} parent=1 // pred_fallthru
      _
    // Predicated region
    $region30: #{tpu_custom_call.1} parent=1 // pred_check
      _
    $region31: #{tpu_custom_call.1} parent=1 // pred_check_branch
      %69 = sbr.rel (0) target = $region33
    $region32: #{tpu_custom_call.1} parent=1 // pred_region
      %70 = dma.done [#allocation9], 128
    $region33: #{tpu_custom_call.1} parent=1 // pred_fallthru
      _
    %v71 = vld [vmem:[#allocation2] sm:$0xff]
    %s72 = scalar_lea.vmem [#allocation2], 8
    %v73 = vld [vmem:[%s72] sm:$0xff]
    %v74 = vmax.f32 %v71, %v73
    %s75 = scalar_lea.vmem [#allocation2], 16
    %v76 = vld [vmem:[%s75] sm:$0xff]
    %v77 = vmax.f32 %v74, %v76
    %v78 = vld [vmem:[#allocation8] sm:$0xff]
    %v79 = vld [vmem:[#allocation5] sm:$0xff]
    %v80 = vld [vmem:[#allocation5 + $0x8] sm:$0xff]
    %v81 = vld [vmem:[#allocation5 + $0x10] sm:$0xff]
    %v82 = vld [vmem:[#allocation5 + $0x18] sm:$0xff]
    %v83 = vld [vmem:[#allocation5 + $0x20] sm:$0xff]
    %v84 = vld [vmem:[#allocation5 + $0x28] sm:$0xff]
    %v85 = vld [vmem:[#allocation5 + $0x30] sm:$0xff]
    %v86 = vld [vmem:[#allocation5 + $0x38] sm:$0xff]
    %v87 = vld [vmem:[#allocation5 + $0x40] sm:$0xff]
    %v88 = vld [vmem:[#allocation5 + $0x48] sm:$0xff]
    %v89 = vld [vmem:[#allocation5 + $0x50] sm:$0xff]
    %v90 = vld [vmem:[#allocation5 + $0x58] sm:$0xff]
    %v91 = vld [vmem:[#allocation5 + $0x60] sm:$0xff]
    %v92 = vld [vmem:[#allocation5 + $0x68] sm:$0xff]
    %v93 = vld [vmem:[#allocation5 + $0x70] sm:$0xff]
    %v94 = vld [vmem:[#allocation5 + $0x78] sm:$0xff]
    %v95 = vld [vmem:[#allocation5 + $0x80] sm:$0xff]
    %v96 = vld [vmem:[#allocation5 + $0x88] sm:$0xff]
    %v97 = vld [vmem:[#allocation5 + $0x90] sm:$0xff]
    %v98 = vld [vmem:[#allocation5 + $0x98] sm:$0xff]
    %v99 = vld [vmem:[#allocation5 + $0xa0] sm:$0xff]
    %v100 = vld [vmem:[#allocation5 + $0xa8] sm:$0xff]
    %v101 = vld [vmem:[#allocation5 + $0xb0] sm:$0xff]
    %v102 = vld [vmem:[#allocation5 + $0xb8] sm:$0xff]
    %v103 = vld [vmem:[#allocation5 + $0xc0] sm:$0xff]
    %v104 = vld [vmem:[#allocation5 + $0xc8] sm:$0xff]
    %v105 = vld [vmem:[#allocation5 + $0xd0] sm:$0xff]
    %v106 = vld [vmem:[#allocation5 + $0xd8] sm:$0xff]
    %v107 = vld [vmem:[#allocation5 + $0xe0] sm:$0xff]
    %v108 = vld [vmem:[#allocation5 + $0xe8] sm:$0xff]
    %v109 = vld [vmem:[#allocation5 + $0xf0] sm:$0xff]
    %v110 = vld [vmem:[#allocation5 + $0xf8] sm:$0xff]
    %111 = vadd.xlane.f32.xlu0 %v77
    %v112 = vpop.xlane.xlu0 %111
    %v113 = vmul.f32 %v77, %v77
    %114 = vadd.xlane.f32.xlu0 %v113
    %v115 = vpop.xlane.xlu0 %114
    %v116 = vmul.f32 %v112, 0.0078125
    %v117 = vmul.f32 %v115, 0.0078125
    %v118 = vmul.f32 %v116, %v116
    %v119 = vsub.f32 %v117, %v118
    %v120 = vsub.f32 %v77, %v116
    %v121 = vadd.f32 %v119, 1e-05
    %v122 = vrsqrt.pop %v121
    %v123 = vmul.f32 %v120, %v122
    %v124 = vlaneseq
    %v125 = vshrl.u32 %v124, 7
    %v126 = vsub.s32 0, %v125
    %v127 = vrot.slane %v78, %v126
    %128 = vmatprep.subr.mxu0 0.0
    %129 = vmatpush1.msra.mxu0 %v109
    %130 = vmatprep.subr.mxu0 0.0
    %131 = vmatpush1.msra.mxu0 %v107
    %132 = vmatprep.subr.mxu0 0.0
    %133 = vmatpush1.msra.mxu0 %v105
    %134 = vmatprep.subr.mxu0 0.0
    %135 = vmatpush1.msra.mxu0 %v103
    %136 = vmatprep.subr.mxu0 0.0
    %137 = vmatpush1.msra.mxu0 %v101
    %138 = vmatprep.subr.mxu0 0.0
    %139 = vmatpush1.msra.mxu0 %v99
    %140 = vmatprep.subr.mxu0 0.0
    %141 = vmatpush1.msra.mxu0 %v97
    %142 = vmatprep.subr.mxu0 0.0
    %143 = vmatpush1.msra.mxu0 %v95
    %144 = vmatprep.subr.mxu0 0.0
    %145 = vmatpush1.msra.mxu0 %v93
    %146 = vmatprep.subr.mxu0 0.0
    %147 = vmatpush1.msra.mxu0 %v91
    %148 = vmatprep.subr.mxu0 0.0
    %149 = vmatpush1.msra.mxu0 %v89
    %150 = vmatprep.subr.mxu0 0.0
    %151 = vmatpush1.msra.mxu0 %v87
    %152 = vmatprep.subr.mxu0 0.0
    %153 = vmatpush1.msra.mxu0 %v85
    %154 = vmatprep.subr.mxu0 0.0
    %155 = vmatpush1.msra.mxu0 %v83
    %156 = vmatprep.subr.mxu0 0.0
    %157 = vmatpush1.msra.mxu0 %v81
    %158 = vmatprep.subr.mxu0 0.0
    %159 = vmatpush1.msra.mxu0 %v79
    %160 = vmatprep.subr.mxu0 0.0
    %161 = vmatpush2.msra.mxu0 0.0
    %162 = vmatprep.subr.mxu0 0.0
    %163 = vmatpush2.msra.mxu0 0.0
    %164 = vmatprep.subr.mxu0 0.0
    %165 = vmatpush2.msra.mxu0 0.0
    %166 = vmatprep.subr.mxu0 0.0
    %167 = vmatpush2.msra.mxu0 0.0
    %168 = vmatprep.subr.mxu0 0.0
    %169 = vmatpush2.msra.mxu0 0.0
    %170 = vmatprep.subr.mxu0 0.0
    %171 = vmatpush2.msra.mxu0 0.0
    %172 = vmatprep.subr.mxu0 0.0
    %173 = vmatpush2.msra.mxu0 0.0
    %174 = vmatprep.subr.mxu0 0.0
    %175 = vmatpush2.msra.mxu0 0.0
    %176 = vmatprep.subr.mxu0 0.0
    %177 = vmatpush2.msra.mxu0 0.0
    %178 = vmatprep.subr.mxu0 0.0
    %179 = vmatpush2.msra.mxu0 0.0
    %180 = vmatprep.subr.mxu0 0.0
    %181 = vmatpush2.msra.mxu0 0.0
    %182 = vmatprep.subr.mxu0 0.0
    %183 = vmatpush2.msra.mxu0 0.0
    %184 = vmatprep.subr.mxu0 0.0
    %185 = vmatpush2.msra.mxu0 0.0
    %186 = vmatprep.subr.mxu0 0.0
    %187 = vmatpush2.msra.mxu0 0.0
    %188 = vmatprep.subr.mxu0 0.0
    %189 = vmatpush2.msra.mxu0 0.0
    %190 = vmatprep.subr.mxu0 0.0
    %191 = vmatpush2.msra.mxu0 0.0
    %192 = vmatprep.mubr.f32.mxu0 0.0
    %193 = vmatmul.mubr.f32.gmra.mxu0 %v123
    %v194 = vpop.f32.mrf.mxu0
    %v195 = vadd.f32 %v127, %v194
    %v196 = vpop.f32.mrf.mxu0
    %197 = vdwg.mxu0
    %v198 = vlaneseq
    %v199 = vshrl.u32 %v198, 7
    %v200 = vsub.s32 1, %v199
    %v201 = vrot.slane %v78, %v200
    %202 = vmatprep.subr.mxu0 0.0
    %203 = vmatpush1.msra.mxu0 %v110
    %204 = vmatprep.subr.mxu0 0.0
    %205 = vmatpush1.msra.mxu0 %v108
    %206 = vmatprep.subr.mxu0 0.0
    %207 = vmatpush1.msra.mxu0 %v106
    %208 = vmatprep.subr.mxu0 0.0
    %209 = vmatpush1.msra.mxu0 %v104
    %210 = vmatprep.subr.mxu0 0.0
    %211 = vmatpush1.msra.mxu0 %v102
    %212 = vmatprep.subr.mxu0 0.0
    %213 = vmatpush1.msra.mxu0 %v100
    %214 = vmatprep.subr.mxu0 0.0
    %215 = vmatpush1.msra.mxu0 %v98
    %216 = vmatprep.subr.mxu0 0.0
    %217 = vmatpush1.msra.mxu0 %v96
    %218 = vmatprep.subr.mxu0 0.0
    %219 = vmatpush1.msra.mxu0 %v94
    %220 = vmatprep.subr.mxu0 0.0
    %221 = vmatpush1.msra.mxu0 %v92
    %222 = vmatprep.subr.mxu0 0.0
    %223 = vmatpush1.msra.mxu0 %v90
    %224 = vmatprep.subr.mxu0 0.0
    %225 = vmatpush1.msra.mxu0 %v88
    %226 = vmatprep.subr.mxu0 0.0
    %227 = vmatpush1.msra.mxu0 %v86
    %228 = vmatprep.subr.mxu0 0.0
    %229 = vmatpush1.msra.mxu0 %v84
    %230 = vmatprep.subr.mxu0 0.0
    %231 = vmatpush1.msra.mxu0 %v82
    %232 = vmatprep.subr.mxu0 0.0
    %233 = vmatpush1.msra.mxu0 %v80
    %234 = vmatprep.subr.mxu0 0.0
    %235 = vmatpush2.msra.mxu0 0.0
    %236 = vmatprep.subr.mxu0 0.0
    %237 = vmatpush2.msra.mxu0 0.0
    %238 = vmatprep.subr.mxu0 0.0
    %239 = vmatpush2.msra.mxu0 0.0
    %240 = vmatprep.subr.mxu0 0.0
    %241 = vmatpush2.msra.mxu0 0.0
    %242 = vmatprep.subr.mxu0 0.0
    %243 = vmatpush2.msra.mxu0 0.0
    %244 = vmatprep.subr.mxu0 0.0
    %245 = vmatpush2.msra.mxu0 0.0
    %246 = vmatprep.subr.mxu0 0.0
    %247 = vmatpush2.msra.mxu0 0.0
    %248 = vmatprep.subr.mxu0 0.0
    %249 = vmatpush2.msra.mxu0 0.0
    %250 = vmatprep.subr.mxu0 0.0
    %251 = vmatpush2.msra.mxu0 0.0
    %252 = vmatprep.subr.mxu0 0.0
    %253 = vmatpush2.msra.mxu0 0.0
    %254 = vmatprep.subr.mxu0 0.0
    %255 = vmatpush2.msra.mxu0 0.0
    %256 = vmatprep.subr.mxu0 0.0
    %257 = vmatpush2.msra.mxu0 0.0
    %258 = vmatprep.subr.mxu0 0.0
    %259 = vmatpush2.msra.mxu0 0.0
    %260 = vmatprep.subr.mxu0 0.0
    %261 = vmatpush2.msra.mxu0 0.0
    %262 = vmatprep.subr.mxu0 0.0
    %263 = vmatpush2.msra.mxu0 0.0
    %264 = vmatprep.subr.mxu0 0.0
    %265 = vmatpush2.msra.mxu0 0.0
    %266 = vmatprep.mubr.f32.mxu0 0.0
    %267 = vmatmul.mubr.f32.gmra.mxu0 %v195
    %v268 = vpop.f32.mrf.mxu0
    %v269 = vadd.f32 %v201, %v268
    %v270 = vpop.f32.mrf.mxu0
    %271 = vdwg.mxu0
    %272 = vadd.xlane.f32.xlu0 %v269
    %v273 = vpop.xlane.xlu0 %272
    %v274 = vmul.f32 %v269, %v269
    %275 = vadd.xlane.f32.xlu0 %v274
    %v276 = vpop.xlane.xlu0 %275
    %v277 = vmul.f32 %v273, 0.0078125
    %v278 = vmul.f32 %v276, 0.0078125
    %v279 = vmul.f32 %v277, %v277
    %v280 = vsub.f32 %v278, %v279
    %v281 = vsub.f32 %v269, %v277
    %v282 = vadd.f32 %v280, 1e-05
    %v283 = vrsqrt.pop %v282
    %v284 = vmul.f32 %v281, %v283
    %s285 = scalar_lea.vmem [#allocation5], 256
    %v286 = vld [vmem:[%s285] sm:$0xff]
    %v287 = vld [vmem:[%s285 + $0x8] sm:$0xff]
    %v288 = vld [vmem:[%s285 + $0x10] sm:$0xff]
    %v289 = vld [vmem:[%s285 + $0x18] sm:$0xff]
    %v290 = vld [vmem:[%s285 + $0x20] sm:$0xff]
    %v291 = vld [vmem:[%s285 + $0x28] sm:$0xff]
    %v292 = vld [vmem:[%s285 + $0x30] sm:$0xff]
    %v293 = vld [vmem:[%s285 + $0x38] sm:$0xff]
    %v294 = vld [vmem:[%s285 + $0x40] sm:$0xff]
    %v295 = vld [vmem:[%s285 + $0x48] sm:$0xff]
    %v296 = vld [vmem:[%s285 + $0x50] sm:$0xff]
    %v297 = vld [vmem:[%s285 + $0x58] sm:$0xff]
    %v298 = vld [vmem:[%s285 + $0x60] sm:$0xff]
    %v299 = vld [vmem:[%s285 + $0x68] sm:$0xff]
    %v300 = vld [vmem:[%s285 + $0x70] sm:$0xff]
    %v301 = vld [vmem:[%s285 + $0x78] sm:$0xff]
    %v302 = vld [vmem:[%s285 + $0x80] sm:$0xff]
    %v303 = vld [vmem:[%s285 + $0x88] sm:$0xff]
    %v304 = vld [vmem:[%s285 + $0x90] sm:$0xff]
    %v305 = vld [vmem:[%s285 + $0x98] sm:$0xff]
    %v306 = vld [vmem:[%s285 + $0xa0] sm:$0xff]
    %v307 = vld [vmem:[%s285 + $0xa8] sm:$0xff]
    %v308 = vld [vmem:[%s285 + $0xb0] sm:$0xff]
    %v309 = vld [vmem:[%s285 + $0xb8] sm:$0xff]
    %v310 = vld [vmem:[%s285 + $0xc0] sm:$0xff]
    %v311 = vld [vmem:[%s285 + $0xc8] sm:$0xff]
    %v312 = vld [vmem:[%s285 + $0xd0] sm:$0xff]
    %v313 = vld [vmem:[%s285 + $0xd8] sm:$0xff]
    %v314 = vld [vmem:[%s285 + $0xe0] sm:$0xff]
    %v315 = vld [vmem:[%s285 + $0xe8] sm:$0xff]
    %v316 = vld [vmem:[%s285 + $0xf0] sm:$0xff]
    %v317 = vld [vmem:[%s285 + $0xf8] sm:$0xff]
    %v319 = vlaneseq
    %v320 = vshrl.u32 %v319, 7
    %v321 = vsub.s32 2, %v320
    %v322 = vrot.slane %v78, %v321
    %v323 = vlaneseq
    %v324 = vshrl.u32 %v323, 7
    %v325 = vsub.s32 6, %v324
    %v326 = vrot.slane %v78, %v325
    %v329 = vlaneseq
    %v330 = vshrl.u32 %v329, 7
    %v331 = vsub.s32 2, %v330
    %v332 = vrot.slane %v322, %v331
    %v333 = vlaneseq
    %v334 = vshrl.u32 %v333, 7
    %v335 = vsub.s32 2, %v334
    %v336 = vrot.slane %v326, %v335
    %337 = vmatprep.subr.mxu0 %v317
    %338 = vmatpush1.msra.mxu0 %v316
    %339 = vmatprep.subr.mxu0 %v315
    %340 = vmatpush1.msra.mxu0 %v314
    %341 = vmatprep.subr.mxu0 %v313
    %342 = vmatpush1.msra.mxu0 %v312
    %343 = vmatprep.subr.mxu0 %v311
    %344 = vmatpush1.msra.mxu0 %v310
    %345 = vmatprep.subr.mxu0 %v309
    %346 = vmatpush1.msra.mxu0 %v308
    %347 = vmatprep.subr.mxu0 %v307
    %348 = vmatpush1.msra.mxu0 %v306
    %349 = vmatprep.subr.mxu0 %v305
    %350 = vmatpush1.msra.mxu0 %v304
    %351 = vmatprep.subr.mxu0 %v303
    %352 = vmatpush1.msra.mxu0 %v302
    %353 = vmatprep.subr.mxu0 %v301
    %354 = vmatpush1.msra.mxu0 %v300
    %355 = vmatprep.subr.mxu0 %v299
    %356 = vmatpush1.msra.mxu0 %v298
    %357 = vmatprep.subr.mxu0 %v297
    %358 = vmatpush1.msra.mxu0 %v296
    %359 = vmatprep.subr.mxu0 %v295
    %360 = vmatpush1.msra.mxu0 %v294
    %361 = vmatprep.subr.mxu0 %v293
    %362 = vmatpush1.msra.mxu0 %v292
    %363 = vmatprep.subr.mxu0 %v291
    %364 = vmatpush1.msra.mxu0 %v290
    %365 = vmatprep.subr.mxu0 %v289
    %366 = vmatpush1.msra.mxu0 %v288
    %367 = vmatprep.subr.mxu0 %v287
    %368 = vmatpush1.msra.mxu0 %v286
    %369 = vmatprep.subr.mxu0 0.0
    %370 = vmatpush2.msra.mxu0 0.0
    %371 = vmatprep.subr.mxu0 0.0
    %372 = vmatpush2.msra.mxu0 0.0
    %373 = vmatprep.subr.mxu0 0.0
    %374 = vmatpush2.msra.mxu0 0.0
    %375 = vmatprep.subr.mxu0 0.0
    %376 = vmatpush2.msra.mxu0 0.0
    %377 = vmatprep.subr.mxu0 0.0
    %378 = vmatpush2.msra.mxu0 0.0
    %379 = vmatprep.subr.mxu0 0.0
    %380 = vmatpush2.msra.mxu0 0.0
    %381 = vmatprep.subr.mxu0 0.0
    %382 = vmatpush2.msra.mxu0 0.0
    %383 = vmatprep.subr.mxu0 0.0
    %384 = vmatpush2.msra.mxu0 0.0
    %385 = vmatprep.subr.mxu0 0.0
    %386 = vmatpush2.msra.mxu0 0.0
    %387 = vmatprep.subr.mxu0 0.0
    %388 = vmatpush2.msra.mxu0 0.0
    %389 = vmatprep.subr.mxu0 0.0
    %390 = vmatpush2.msra.mxu0 0.0
    %391 = vmatprep.subr.mxu0 0.0
    %392 = vmatpush2.msra.mxu0 0.0
    %393 = vmatprep.subr.mxu0 0.0
    %394 = vmatpush2.msra.mxu0 0.0
    %395 = vmatprep.subr.mxu0 0.0
    %396 = vmatpush2.msra.mxu0 0.0
    %397 = vmatprep.subr.mxu0 0.0
    %398 = vmatpush2.msra.mxu0 0.0
    %399 = vmatprep.subr.mxu0 0.0
    %400 = vmatpush2.msra.mxu0 0.0
    %401 = vmatprep.mubr.f32.mxu0 0.0
    %402 = vmatmul.mubr.f32.gmra.mxu0 %v284
    %v403 = vpop.f32.mrf.mxu0
    %v404 = vadd.f32 %v332, %v403
    %v405 = vpop.f32.mrf.mxu0
    %v406 = vadd.f32 %v336, %v405
    %407 = vdwg.mxu0
    %v408 = vld [vmem:[#allocation7] sm:$0xff]
    %v409 = vld [vmem:[#allocation7 + $0x8] sm:$0xff]
    %v410 = vld [vmem:[#allocation7 + $0x10] sm:$0xff]
    %v411 = vld [vmem:[#allocation7 + $0x18] sm:$0xff]
    %v412 = vld [vmem:[#allocation7 + $0x20] sm:$0xff]
    %v413 = vld [vmem:[#allocation7 + $0x28] sm:$0xff]
    %v414 = vld [vmem:[#allocation7 + $0x30] sm:$0xff]
    %v415 = vld [vmem:[#allocation7 + $0x38] sm:$0xff]
    %v416 = vld [vmem:[#allocation7 + $0x40] sm:$0xff]
    %v417 = vld [vmem:[#allocation7 + $0x48] sm:$0xff]
    %v418 = vld [vmem:[#allocation7 + $0x50] sm:$0xff]
    %v419 = vld [vmem:[#allocation7 + $0x58] sm:$0xff]
    %v420 = vld [vmem:[#allocation7 + $0x60] sm:$0xff]
    %v421 = vld [vmem:[#allocation7 + $0x68] sm:$0xff]
    %v422 = vld [vmem:[#allocation7 + $0x70] sm:$0xff]
    %v423 = vld [vmem:[#allocation7 + $0x78] sm:$0xff]
    %v424 = vld [vmem:[#allocation7 + $0x80] sm:$0xff]
    %v425 = vld [vmem:[#allocation7 + $0x88] sm:$0xff]
    %v426 = vld [vmem:[#allocation7 + $0x90] sm:$0xff]
    %v427 = vld [vmem:[#allocation7 + $0x98] sm:$0xff]
    %v428 = vld [vmem:[#allocation7 + $0xa0] sm:$0xff]
    %v429 = vld [vmem:[#allocation7 + $0xa8] sm:$0xff]
    %v430 = vld [vmem:[#allocation7 + $0xb0] sm:$0xff]
    %v431 = vld [vmem:[#allocation7 + $0xb8] sm:$0xff]
    %v432 = vld [vmem:[#allocation7 + $0xc0] sm:$0xff]
    %v433 = vld [vmem:[#allocation7 + $0xc8] sm:$0xff]
    %v434 = vld [vmem:[#allocation7 + $0xd0] sm:$0xff]
    %v435 = vld [vmem:[#allocation7 + $0xd8] sm:$0xff]
    %v436 = vld [vmem:[#allocation7 + $0xe0] sm:$0xff]
    %v437 = vld [vmem:[#allocation7 + $0xe8] sm:$0xff]
    %v438 = vld [vmem:[#allocation7 + $0xf0] sm:$0xff]
    %v439 = vld [vmem:[#allocation7 + $0xf8] sm:$0xff]
    %v440 = vlaneseq
    %v441 = vshrl.u32 %v440, 7
    %v442 = vsub.s32 3, %v441
    %v443 = vrot.slane %v78, %v442
    %444 = vmatprep.subr.mxu0 0.0
    %445 = vmatpush1.msra.mxu0 %v423
    %446 = vmatprep.subr.mxu0 0.0
    %447 = vmatpush1.msra.mxu0 %v422
    %448 = vmatprep.subr.mxu0 0.0
    %449 = vmatpush1.msra.mxu0 %v421
    %450 = vmatprep.subr.mxu0 0.0
    %451 = vmatpush1.msra.mxu0 %v420
    %452 = vmatprep.subr.mxu0 0.0
    %453 = vmatpush1.msra.mxu0 %v419
    %454 = vmatprep.subr.mxu0 0.0
    %455 = vmatpush1.msra.mxu0 %v418
    %456 = vmatprep.subr.mxu0 0.0
    %457 = vmatpush1.msra.mxu0 %v417
    %458 = vmatprep.subr.mxu0 0.0
    %459 = vmatpush1.msra.mxu0 %v416
    %460 = vmatprep.subr.mxu0 0.0
    %461 = vmatpush1.msra.mxu0 %v415
    %462 = vmatprep.subr.mxu0 0.0
    %463 = vmatpush1.msra.mxu0 %v414
    %464 = vmatprep.subr.mxu0 0.0
    %465 = vmatpush1.msra.mxu0 %v413
    %466 = vmatprep.subr.mxu0 0.0
    %467 = vmatpush1.msra.mxu0 %v412
    %468 = vmatprep.subr.mxu0 0.0
    %469 = vmatpush1.msra.mxu0 %v411
    %470 = vmatprep.subr.mxu0 0.0
    %471 = vmatpush1.msra.mxu0 %v410
    %472 = vmatprep.subr.mxu0 0.0
    %473 = vmatpush1.msra.mxu0 %v409
    %474 = vmatprep.subr.mxu0 0.0
    %475 = vmatpush1.msra.mxu0 %v408
    %476 = vmatprep.subr.mxu0 0.0
    %477 = vmatpush2.msra.mxu0 %v439
    %478 = vmatprep.subr.mxu0 0.0
    %479 = vmatpush2.msra.mxu0 %v438
    %480 = vmatprep.subr.mxu0 0.0
    %481 = vmatpush2.msra.mxu0 %v437
    %482 = vmatprep.subr.mxu0 0.0
    %483 = vmatpush2.msra.mxu0 %v436
    %484 = vmatprep.subr.mxu0 0.0
    %485 = vmatpush2.msra.mxu0 %v435
    %486 = vmatprep.subr.mxu0 0.0
    %487 = vmatpush2.msra.mxu0 %v434
    %488 = vmatprep.subr.mxu0 0.0
    %489 = vmatpush2.msra.mxu0 %v433
    %490 = vmatprep.subr.mxu0 0.0
    %491 = vmatpush2.msra.mxu0 %v432
    %492 = vmatprep.subr.mxu0 0.0
    %493 = vmatpush2.msra.mxu0 %v431
    %494 = vmatprep.subr.mxu0 0.0
    %495 = vmatpush2.msra.mxu0 %v430
    %496 = vmatprep.subr.mxu0 0.0
    %497 = vmatpush2.msra.mxu0 %v429
    %498 = vmatprep.subr.mxu0 0.0
    %499 = vmatpush2.msra.mxu0 %v428
    %500 = vmatprep.subr.mxu0 0.0
    %501 = vmatpush2.msra.mxu0 %v427
    %502 = vmatprep.subr.mxu0 0.0
    %503 = vmatpush2.msra.mxu0 %v426
    %504 = vmatprep.subr.mxu0 0.0
    %505 = vmatpush2.msra.mxu0 %v425
    %506 = vmatprep.subr.mxu0 0.0
    %507 = vmatpush2.msra.mxu0 %v424
    %508 = vmatprep.mubr.f32.mxu0 %v406
    %509 = vmatmul.mubr.f32.gmra.mxu0 %v404
    %v510 = vpop.f32.mrf.mxu0
    %v511 = vadd.f32 %v443, %v510
    %v512 = vpop.f32.mrf.mxu0
    %513 = vdwg.mxu0
    %514 = vst [vmem:[#allocation10] sm:$0xff] %v511
    // Predicated region
    $region34: #{tpu_custom_call.1} parent=1 // pred_check
      _
    $region35: #{tpu_custom_call.1} parent=1 // pred_check_branch
      %516 = sbr.rel (0) target = $region37
    $region36: #{tpu_custom_call.1} parent=1 // pred_region
      %s518 = ssub.s32 128, 128
      %519 = vsyncadd [#allocation4], %s518
      %s521 = sshll.u32 [#allocation10], 4
      %s522 = int_to_ptr.vmem [resolvable:$true] %s521
      %524 = dma.vmem_to_hbm [thread:$0]  %s522, 128, %s4, [#allocation4]
    $region37: #{tpu_custom_call.1} parent=1 // pred_fallthru
      _
    // Predicated region
    $region38: #{tpu_custom_call.1} parent=1 // pred_check
      _
    $region39: #{tpu_custom_call.1} parent=1 // pred_check_branch
      %526 = sbr.rel (0) target = $region41
    $region40: #{tpu_custom_call.1} parent=1 // pred_region
      %527 = dma.done [#allocation4], 128
    $region41: #{tpu_custom_call.1} parent=1 // pred_fallthru
      _
    %528 = vsyncpa [#allocation3], 1
    %529 = vsyncpa [#allocation6], 1
    %530 = vsyncpa [#allocation9], 1
    %531 = vsyncpa [#allocation4], 1

</llo_original>
